<compile_context>
chip_gen: v7x
topology: tpu7x:2x2x1
jax: 0.10.0
libtpu: 0.0.40
codegen_flags: <defaults>
</compile_context>

<pallas_src>
import math
import functools

import jax
import jax.numpy as jnp
from jax.experimental import pallas as pl
from jax.experimental.pallas import tpu as pltpu


# ---------------------------------------------------------------------------
# Fused kernel: attention adjacency + all GCN layers; one grid step per batch
# tile of Bt examples.  Adjacency, denom reciprocal and layer activations stay
# VMEM-resident for the whole step (no per-layer HBM round trips).
# ---------------------------------------------------------------------------
def _fused_gcn_kernel(x_ref, wqk_ref, bqk_ref, wl_ref, bl_ref,
                      out_ref, adj_ref, *, num_heads, num_layers, d_k):
    Bt, L, D = x_ref.shape

    x3 = x_ref[...]                                   # (Bt, L, D) bf16
    x2 = x3.reshape(Bt * L, D)                        # fill the MXU M dim

    # Fused Q|K projection: a single matmul with doubled N fill.  The Q half
    # of wqk/bqk already carries the 1/sqrt(d_k) scale (folded at trace time),
    # so the (L, L) score tensors need no extra scaling multiply.
    qk2 = jnp.dot(x2, wqk_ref[...],
                  preferred_element_type=jnp.float32) + bqk_ref[...]  # (Bt*L, 2D) f32

    # Heads processed sequentially: peak score VMEM is (Bt, L, L), not
    # (H*Bt, L, L); the head-mean is accumulated directly (no concat/copies).
    # TODO(synk): for production configs make d_k a multiple of 128 so these
    #             per-head lane slices are lane-aligned (no relayout).
    adj = None
    for h in range(num_heads):
        q_h = qk2[:, h * d_k:(h + 1) * d_k].reshape(Bt, L, d_k)
        k_h = qk2[:, D + h * d_k:D + (h + 1) * d_k].reshape(Bt, L, d_k)
        s = jnp.einsum('bqd,bkd->bqk',
                       q_h.astype(jnp.bfloat16), k_h.astype(jnp.bfloat16),
                       preferred_element_type=jnp.float32)        # (Bt, L, L)
        s = s - jnp.max(s, axis=-1, keepdims=True)
        e = jnp.exp(s)
        p = e * pl.reciprocal(jnp.sum(e, axis=-1, keepdims=True), approx=True)
        adj = p if adj is None else adj + p
    adj = adj * (1.0 / num_heads)                     # (Bt, L, L) f32

    # diagonal forced to 1   (adj - diag(adj) + I)
    row = jax.lax.broadcasted_iota(jnp.int32, (L, L), 0)
    col = jax.lax.broadcasted_iota(jnp.int32, (L, L), 1)
    adj = jnp.where((row == col)[None, :, :], 1.0, adj)

    adj_ref[...] = adj.astype(adj_ref.dtype)

    # denom computed ONCE, reused across all layers.  Exact reciprocal here:
    # an approx error would be applied multiplicatively at every layer.
    inv_denom = 1.0 / (jnp.sum(adj, axis=2, keepdims=True) + 1.0)  # (Bt, L, 1)

    adj_mm = adj.astype(jnp.bfloat16)                 # MXU operand
    h_act = x3                                        # layer-0 input (bf16)
    for layer in range(num_layers):
        # Ax = adj @ h  (batched over Bt, f32 accumulation)
        ax = jnp.einsum('bij,bjd->bid', adj_mm, h_act.astype(jnp.bfloat16),
                        preferred_element_type=jnp.float32)        # (Bt, L, D)
        # AxW = Ax @ W + b on a (Bt*L, D) slab (MXU M filled)
        axw = jnp.dot(ax.reshape(Bt * L, D).astype(jnp.bfloat16),
                      wl_ref[layer],
                      preferred_element_type=jnp.float32) + bl_ref[layer]
        axw = axw.reshape(Bt, L, D) * inv_denom
        h_act = jnp.maximum(axw, 0.0)                 # ReLU
        # TODO(synk): gcn_drop / attention dropout are identity (eval mode).

    out_ref[...] = h_act.astype(out_ref.dtype)


# ---------------------------------------------------------------------------
# Generation-aware VMEM budget / tiling targets
# ---------------------------------------------------------------------------
def _tpu_generation_config():
    """Returns (vmem_limit_bytes, rows_target, min_grid_steps)."""
    try:
        vmem_phys = pltpu.get_tpu_info().vmem_capacity_bytes
    except Exception:
        vmem_phys = 64 * 1024 * 1024                  # conservative default
    if vmem_phys >= 128 * 1024 * 1024:
        # v5e / v6e class: 128 MiB VMEM, 1 TensorCore -> few fat grid steps.
        return 100 * 1024 * 1024, 512, 1
    # v7x class: 64 MiB physical VMEM, 2 TensorCores -> headroom + >=2 steps.
    return 48 * 1024 * 1024, 256, 2


def _pick_batch_tile(B, L, D, num_layers, vmem_budget, rows_target,
                     min_grid_steps):
    """Largest Bt whose estimated per-step VMEM footprint fits the budget."""
    def footprint(bt):
        rows = bt * L
        io = (2 * rows * D * 2            # x block (bf16), double-buffered
              + 2 * rows * D * 4          # out block (f32), double-buffered
              + 2 * bt * L * L * 4)       # adj block, double-buffered
        weights = ((2 * D * D + num_layers * D * D) * 2
                   + (2 * D + num_layers * D) * 4)
        temps = (rows * 2 * D * 4         # fused Q|K projection (f32)
                 + 3 * bt * L * L * 4     # per-head s/e/p (heads sequential)
                 + bt * L * L * (4 + 2)   # adj f32 + adj bf16
                 + 3 * rows * D * 4)      # ax / axw / h_act (f32)
        return io + weights + temps

    bt, cand = 1, 1
    while cand <= B:
        if footprint(cand) > vmem_budget:
            break
        bt = cand
        if cand * L >= rows_target:
            break
        cand += 1
    if min_grid_steps > 1 and B >= min_grid_steps:
        bt = min(bt, pl.cdiv(B, min_grid_steps))      # keep both cores busy
    return max(1, bt)


# ---------------------------------------------------------------------------
# Wrapper: weight fusion/stacking, footprint-derived batch tiling, pallas_call
# ---------------------------------------------------------------------------
def gcn_forward(gcn_inputs, params, num_heads, num_layers,
                adj_dtype=jnp.float32):
    B, L, D = gcn_inputs.shape
    assert D % num_heads == 0, "mem_dim must be divisible by num_heads"
    d_k = D // num_heads

    wl = jnp.stack(params["Wl"], axis=0)              # (num_layers, D, D)
    bl = jnp.stack(params["bl"], axis=0).astype(jnp.float32)
    assert wl.shape == (num_layers, D, D), \
        "isatt=1 path requires in_dim == mem_dim"
    # TODO(synk): in production pick mem_dim (and L) as multiples of 128 so
    #             MXU K/N lanes are filled and output stores are unmasked.

    # Fold the 1/sqrt(d_k) attention scale into the Q projection and fuse Q|K
    # into one (D, 2D) bf16 weight (one matmul, 2x N fill).  Biases stay f32
    # and are added after f32 accumulation.
    scale = 1.0 / math.sqrt(d_k)
    wqk = jnp.concatenate([params["Wq"] * scale, params["Wk"]],
                          axis=1).astype(jnp.bfloat16)            # (D, 2D)
    bqk = jnp.concatenate([params["bq"] * scale, params["bk"]],
                          axis=1).astype(jnp.float32)             # (1, 2D)
    wl_bf = wl.astype(jnp.bfloat16)

    vmem_limit, rows_target, min_steps = _tpu_generation_config()
    Bt = _pick_batch_tile(B, L, D, num_layers, vmem_limit, rows_target,
                          min_steps)
    nb = pl.cdiv(B, Bt)

    # No host-side batch pad: a ragged last tile is handled by Pallas
    # partial-block masking (rows are batch-independent, OOB stores dropped).
    x_bf = gcn_inputs.astype(jnp.bfloat16)

    kernel = functools.partial(_fused_gcn_kernel, num_heads=num_heads,
                               num_layers=num_layers, d_k=d_k)

    def _build(single_buffer_weights):
        # Constant-index weight blocks never change across the grid: single
        # buffering hands the 2x reservation back to the VMEM budget.
        kw = ({"pipeline_mode": pl.Buffered(1)} if single_buffer_weights
              else {})
        in_specs = [
            pl.BlockSpec((Bt, L, D), lambda b: (b, 0, 0)),                # x
            pl.BlockSpec((D, 2 * D), lambda b: (0, 0), **kw),             # Wq|Wk
            pl.BlockSpec((1, 2 * D), lambda b: (0, 0), **kw),             # bq|bk
            pl.BlockSpec((num_layers, D, D), lambda b: (0, 0, 0), **kw),  # Wl
            pl.BlockSpec((num_layers, 1, D), lambda b: (0, 0, 0), **kw),  # bl
        ]
        return pl.pallas_call(
            kernel,
            out_shape=(jax.ShapeDtypeStruct((B, L, D), jnp.float32),
                       jax.ShapeDtypeStruct((B, L, L), adj_dtype)),
            grid_spec=pltpu.PrefetchScalarGridSpec(
                num_scalar_prefetch=0,
                grid=(nb,),
                in_specs=in_specs,
                out_specs=[
                    pl.BlockSpec((Bt, L, D), lambda b: (b, 0, 0)),        # out
                    pl.BlockSpec((Bt, L, L), lambda b: (b, 0, 0)),        # adj
                ],
            ),
            compiler_params=pltpu.CompilerParams(
                dimension_semantics=("parallel",),
                vmem_limit_bytes=vmem_limit,
            ),
        )

    try:
        out, adj = _build(True)(x_bf, wqk, bqk, wl_bf, bl)
    except Exception:
        # Fallback if this Pallas build rejects pipeline_mode on the main grid.
        out, adj = _build(False)(x_bf, wqk, bqk, wl_bf, bl)
    return out, adj


# ---------------------------------------------------------------------------
# Pure-JAX reference (f32) for a correctness sanity check
# ---------------------------------------------------------------------------
def gcn_reference(x, params, num_heads, num_layers):
    B, L, D = x.shape
    d_k = D // num_heads
    q = x @ params["Wq"] + params["bq"]
    k = x @ params["Wk"] + params["bk"]
    q = q.reshape(B, L, num_heads, d_k).transpose(0, 2, 1, 3)
    k = k.reshape(B, L, num_heads, d_k).transpose(0, 2, 1, 3)
    s = jnp.einsum('bhqd,bhkd->bhqk', q, k) / math.sqrt(d_k)
    p = jax.nn.softmax(s, axis=-1)
    adj = p.mean(axis=1)
    eye = jnp.eye(L, dtype=adj.dtype)
    adj = adj * (1.0 - eye) + eye
    denom = adj.sum(-1, keepdims=True) + 1.0
    h = x
    for layer in range(num_layers):
        ax = jnp.einsum('bij,bjd->bid', adj, h)
        axw = ax @ params["Wl"][layer] + params["bl"][layer]
        h = jax.nn.relu(axw / denom)
    return h, adj


# ---------------------------------------------------------------------------
# Deterministic parameter init (synthetic, no checkpoint load)
# ---------------------------------------------------------------------------
def init_params(key, in_dim, mem_dim, num_layers):
    keys = jax.random.split(key, 4 + 2 * num_layers)
    scale = 0.05
    params = {
        "Wq": scale * jax.random.normal(keys[0], (mem_dim, mem_dim), jnp.float32),
        "bq": scale * jax.random.normal(keys[1], (1, mem_dim), jnp.float32),
        "Wk": scale * jax.random.normal(keys[2], (mem_dim, mem_dim), jnp.float32),
        "bk": scale * jax.random.normal(keys[3], (1, mem_dim), jnp.float32),
        "Wl": [],
        "bl": [],
    }
    for layer in range(num_layers):
        d_in = in_dim if layer == 0 else mem_dim
        params["Wl"].append(
            scale * jax.random.normal(keys[4 + 2 * layer], (d_in, mem_dim), jnp.float32))
        params["bl"].append(
            scale * jax.random.normal(keys[5 + 2 * layer], (1, mem_dim), jnp.float32))
    return params


if __name__ == "__main__":
    # small shapes consistent with the module: (B, L, in_dim) node features
    B, L = 2, 8
    in_dim = mem_dim = 32   # attention requires gcn_inputs feature dim == mem_dim
    num_layers = 2
    num_heads = 4

    key = jax.random.PRNGKey(0)
    k_x, k_p = jax.random.split(key)
    gcn_inputs = jax.random.normal(k_x, (B, L, in_dim), jnp.float32)
    params = init_params(k_p, in_dim, mem_dim, num_layers)

    outputs, adj_ag = gcn_forward(gcn_inputs, params, num_heads, num_layers)
    jax.block_until_ready(outputs)
    jax.block_until_ready(adj_ag)

    assert outputs.shape == (B, L, mem_dim)
    assert adj_ag.shape == (B, L, L)

    # sanity check against the f32 pure-JAX reference (bf16 MXU operands +
    # approx softmax reciprocal => loose tolerance)
    out_expected, adj_expected = gcn_reference(gcn_inputs, params,
                                               num_heads, num_layers)
    assert jnp.allclose(adj_ag, adj_expected, atol=3e-2, rtol=3e-2)
    assert jnp.allclose(outputs, out_expected, atol=3e-2, rtol=3e-2)

    print("KERNEL_OK")
</pallas_src>

<mosaic_0001>
module attributes {stable_mosaic.version = 11 : i64} {
  func.func @_fused_gcn_kernel(%arg0: i32, %arg1: memref<1x8x32xbf16, #tpu.memory_space<vmem>>, %arg2: memref<32x64xbf16, #tpu.memory_space<vmem>>, %arg3: memref<1x64xf32, #tpu.memory_space<vmem>>, %arg4: memref<2x32x32xbf16, #tpu.memory_space<vmem>>, %arg5: memref<2x1x32xf32, #tpu.memory_space<vmem>>, %arg6: memref<1x8x32xf32, #tpu.memory_space<vmem>>, %arg7: memref<1x8x8xf32, #tpu.memory_space<vmem>>) attributes {dimension_semantics = [#tpu.dimension_semantics<parallel>], iteration_bounds = array<i64: 2>, scalar_prefetch = 0 : i64, scratch_operands = 0 : i64, tpu.core_type = #tpu.core_type<tc>, window_params = [{transform_indices = @transform_0, window_bounds = array<i64: 1, 8, 32>}, {pipeline_mode = #tpu.pipeline_mode<synchronous>, transform_indices = @transform_1, window_bounds = array<i64: 32, 64>}, {pipeline_mode = #tpu.pipeline_mode<synchronous>, transform_indices = @transform_2, window_bounds = array<i64: 1, 64>}, {pipeline_mode = #tpu.pipeline_mode<synchronous>, transform_indices = @transform_3, window_bounds = array<i64: 2, 32, 32>}, {pipeline_mode = #tpu.pipeline_mode<synchronous>, transform_indices = @transform_4, window_bounds = array<i64: 2, 1, 32>}, {transform_indices = @transform_5, window_bounds = array<i64: 1, 8, 32>}, {transform_indices = @transform_6, window_bounds = array<i64: 1, 8, 8>}]} {
    %c0 = arith.constant 0 : index
    %c0_0 = arith.constant 0 : index
    %c0_1 = arith.constant 0 : index
    %0 = vector.load %arg1[%c0, %c0_0, %c0_1] : memref<1x8x32xbf16, #tpu.memory_space<vmem>>, vector<1x8x32xbf16>
    %1 = vector.shape_cast %0 : vector<1x8x32xbf16> to vector<8x32xbf16>
    %c0_2 = arith.constant 0 : index
    %c0_3 = arith.constant 0 : index
    %2 = vector.load %arg2[%c0_2, %c0_3] : memref<32x64xbf16, #tpu.memory_space<vmem>>, vector<32x64xbf16>
    %cst = arith.constant dense<0.000000e+00> : vector<8x64xf32>
    %3 = tpu.matmul %1, %2, %cst {dimension_numbers = #tpu.dot_dimension_numbers<[1], [0], [0], [1], [0, 0, 1, 1], [], []>} : vector<8x32xbf16>, vector<32x64xbf16>, vector<8x64xf32> -> vector<8x64xf32>
    %c0_4 = arith.constant 0 : index
    %c0_5 = arith.constant 0 : index
    %4 = vector.load %arg3[%c0_4, %c0_5] : memref<1x64xf32, #tpu.memory_space<vmem>>, vector<1x64xf32>
    %5 = vector.broadcast %4 : vector<1x64xf32> to vector<8x64xf32>
    %6 = arith.addf %3, %5 : vector<8x64xf32>
    %7 = vector.extract_strided_slice %6 {offsets = [0, 0], sizes = [8, 8], strides = [1, 1]} : vector<8x64xf32> to vector<8x8xf32>
    %8 = vector.shape_cast %7 : vector<8x8xf32> to vector<1x8x8xf32>
    %9 = vector.extract_strided_slice %6 {offsets = [0, 32], sizes = [8, 8], strides = [1, 1]} : vector<8x64xf32> to vector<8x8xf32>
    %10 = vector.shape_cast %9 : vector<8x8xf32> to vector<1x8x8xf32>
    %11 = arith.truncf %8 : vector<1x8x8xf32> to vector<1x8x8xbf16>
    %12 = arith.truncf %10 : vector<1x8x8xf32> to vector<1x8x8xbf16>
    "tpu.trace_start"() <{level = 10 : i32, message = "bqd,bkd->bqk"}> : () -> ()
    %cst_6 = arith.constant dense<0.000000e+00> : vector<1x8x8xf32>
    %13 = tpu.matmul %11, %12, %cst_6 {dimension_numbers = #tpu.dot_dimension_numbers<[2], [2], [1], [1], [0, 0, 0, 1, 1, 1], [0], [0]>} : vector<1x8x8xbf16>, vector<1x8x8xbf16>, vector<1x8x8xf32> -> vector<1x8x8xf32>
    "tpu.trace_stop"() : () -> ()
    %cst_7 = arith.constant dense<0xFF800000> : vector<1x8xf32>
    %14 = vector.multi_reduction <maximumf>, %13, %cst_7 [2] : vector<1x8x8xf32> to vector<1x8xf32>
    %15 = vector.shape_cast %14 : vector<1x8xf32> to vector<1x8x1xf32>
    %16 = vector.broadcast %15 : vector<1x8x1xf32> to vector<1x8x8xf32>
    %17 = arith.subf %13, %16 : vector<1x8x8xf32>
    %18 = math.exp %17 : vector<1x8x8xf32>
    %cst_8 = arith.constant dense<0.000000e+00> : vector<1x8xf32>
    %19 = vector.multi_reduction <add>, %18, %cst_8 [2] : vector<1x8x8xf32> to vector<1x8xf32>
    %20 = vector.shape_cast %19 : vector<1x8xf32> to vector<1x8x1xf32>
    %21 = tpu.reciprocal %20 {approx = true} : vector<1x8x1xf32> -> vector<1x8x1xf32>
    %22 = vector.broadcast %21 : vector<1x8x1xf32> to vector<1x8x8xf32>
    %23 = arith.mulf %18, %22 : vector<1x8x8xf32>
    %24 = vector.extract_strided_slice %6 {offsets = [0, 8], sizes = [8, 8], strides = [1, 1]} : vector<8x64xf32> to vector<8x8xf32>
    %25 = vector.shape_cast %24 : vector<8x8xf32> to vector<1x8x8xf32>
    %26 = vector.extract_strided_slice %6 {offsets = [0, 40], sizes = [8, 8], strides = [1, 1]} : vector<8x64xf32> to vector<8x8xf32>
    %27 = vector.shape_cast %26 : vector<8x8xf32> to vector<1x8x8xf32>
    %28 = arith.truncf %25 : vector<1x8x8xf32> to vector<1x8x8xbf16>
    %29 = arith.truncf %27 : vector<1x8x8xf32> to vector<1x8x8xbf16>
    "tpu.trace_start"() <{level = 10 : i32, message = "bqd,bkd->bqk"}> : () -> ()
    %cst_9 = arith.constant dense<0.000000e+00> : vector<1x8x8xf32>
    %30 = tpu.matmul %28, %29, %cst_9 {dimension_numbers = #tpu.dot_dimension_numbers<[2], [2], [1], [1], [0, 0, 0, 1, 1, 1], [0], [0]>} : vector<1x8x8xbf16>, vector<1x8x8xbf16>, vector<1x8x8xf32> -> vector<1x8x8xf32>
    "tpu.trace_stop"() : () -> ()
    %cst_10 = arith.constant dense<0xFF800000> : vector<1x8xf32>
    %31 = vector.multi_reduction <maximumf>, %30, %cst_10 [2] : vector<1x8x8xf32> to vector<1x8xf32>
    %32 = vector.shape_cast %31 : vector<1x8xf32> to vector<1x8x1xf32>
    %33 = vector.broadcast %32 : vector<1x8x1xf32> to vector<1x8x8xf32>
    %34 = arith.subf %30, %33 : vector<1x8x8xf32>
    %35 = math.exp %34 : vector<1x8x8xf32>
    %cst_11 = arith.constant dense<0.000000e+00> : vector<1x8xf32>
    %36 = vector.multi_reduction <add>, %35, %cst_11 [2] : vector<1x8x8xf32> to vector<1x8xf32>
    %37 = vector.shape_cast %36 : vector<1x8xf32> to vector<1x8x1xf32>
    %38 = tpu.reciprocal %37 {approx = true} : vector<1x8x1xf32> -> vector<1x8x1xf32>
    %39 = vector.broadcast %38 : vector<1x8x1xf32> to vector<1x8x8xf32>
    %40 = arith.mulf %35, %39 : vector<1x8x8xf32>
    %41 = arith.addf %23, %40 : vector<1x8x8xf32>
    %42 = vector.extract_strided_slice %6 {offsets = [0, 16], sizes = [8, 8], strides = [1, 1]} : vector<8x64xf32> to vector<8x8xf32>
    %43 = vector.shape_cast %42 : vector<8x8xf32> to vector<1x8x8xf32>
    %44 = vector.extract_strided_slice %6 {offsets = [0, 48], sizes = [8, 8], strides = [1, 1]} : vector<8x64xf32> to vector<8x8xf32>
    %45 = vector.shape_cast %44 : vector<8x8xf32> to vector<1x8x8xf32>
    %46 = arith.truncf %43 : vector<1x8x8xf32> to vector<1x8x8xbf16>
    %47 = arith.truncf %45 : vector<1x8x8xf32> to vector<1x8x8xbf16>
    "tpu.trace_start"() <{level = 10 : i32, message = "bqd,bkd->bqk"}> : () -> ()
    %cst_12 = arith.constant dense<0.000000e+00> : vector<1x8x8xf32>
    %48 = tpu.matmul %46, %47, %cst_12 {dimension_numbers = #tpu.dot_dimension_numbers<[2], [2], [1], [1], [0, 0, 0, 1, 1, 1], [0], [0]>} : vector<1x8x8xbf16>, vector<1x8x8xbf16>, vector<1x8x8xf32> -> vector<1x8x8xf32>
    "tpu.trace_stop"() : () -> ()
    %cst_13 = arith.constant dense<0xFF800000> : vector<1x8xf32>
    %49 = vector.multi_reduction <maximumf>, %48, %cst_13 [2] : vector<1x8x8xf32> to vector<1x8xf32>
    %50 = vector.shape_cast %49 : vector<1x8xf32> to vector<1x8x1xf32>
    %51 = vector.broadcast %50 : vector<1x8x1xf32> to vector<1x8x8xf32>
    %52 = arith.subf %48, %51 : vector<1x8x8xf32>
    %53 = math.exp %52 : vector<1x8x8xf32>
    %cst_14 = arith.constant dense<0.000000e+00> : vector<1x8xf32>
    %54 = vector.multi_reduction <add>, %53, %cst_14 [2] : vector<1x8x8xf32> to vector<1x8xf32>
    %55 = vector.shape_cast %54 : vector<1x8xf32> to vector<1x8x1xf32>
    %56 = tpu.reciprocal %55 {approx = true} : vector<1x8x1xf32> -> vector<1x8x1xf32>
    %57 = vector.broadcast %56 : vector<1x8x1xf32> to vector<1x8x8xf32>
    %58 = arith.mulf %53, %57 : vector<1x8x8xf32>
    %59 = arith.addf %41, %58 : vector<1x8x8xf32>
    %60 = vector.extract_strided_slice %6 {offsets = [0, 24], sizes = [8, 8], strides = [1, 1]} : vector<8x64xf32> to vector<8x8xf32>
    %61 = vector.shape_cast %60 : vector<8x8xf32> to vector<1x8x8xf32>
    %62 = vector.extract_strided_slice %6 {offsets = [0, 56], sizes = [8, 8], strides = [1, 1]} : vector<8x64xf32> to vector<8x8xf32>
    %63 = vector.shape_cast %62 : vector<8x8xf32> to vector<1x8x8xf32>
    %64 = arith.truncf %61 : vector<1x8x8xf32> to vector<1x8x8xbf16>
    %65 = arith.truncf %63 : vector<1x8x8xf32> to vector<1x8x8xbf16>
    "tpu.trace_start"() <{level = 10 : i32, message = "bqd,bkd->bqk"}> : () -> ()
    %cst_15 = arith.constant dense<0.000000e+00> : vector<1x8x8xf32>
    %66 = tpu.matmul %64, %65, %cst_15 {dimension_numbers = #tpu.dot_dimension_numbers<[2], [2], [1], [1], [0, 0, 0, 1, 1, 1], [0], [0]>} : vector<1x8x8xbf16>, vector<1x8x8xbf16>, vector<1x8x8xf32> -> vector<1x8x8xf32>
    "tpu.trace_stop"() : () -> ()
    %cst_16 = arith.constant dense<0xFF800000> : vector<1x8xf32>
    %67 = vector.multi_reduction <maximumf>, %66, %cst_16 [2] : vector<1x8x8xf32> to vector<1x8xf32>
    %68 = vector.shape_cast %67 : vector<1x8xf32> to vector<1x8x1xf32>
    %69 = vector.broadcast %68 : vector<1x8x1xf32> to vector<1x8x8xf32>
    %70 = arith.subf %66, %69 : vector<1x8x8xf32>
    %71 = math.exp %70 : vector<1x8x8xf32>
    %cst_17 = arith.constant dense<0.000000e+00> : vector<1x8xf32>
    %72 = vector.multi_reduction <add>, %71, %cst_17 [2] : vector<1x8x8xf32> to vector<1x8xf32>
    %73 = vector.shape_cast %72 : vector<1x8xf32> to vector<1x8x1xf32>
    %74 = tpu.reciprocal %73 {approx = true} : vector<1x8x1xf32> -> vector<1x8x1xf32>
    %75 = vector.broadcast %74 : vector<1x8x1xf32> to vector<1x8x8xf32>
    %76 = arith.mulf %71, %75 : vector<1x8x8xf32>
    %77 = arith.addf %59, %76 : vector<1x8x8xf32>
    %cst_18 = arith.constant 2.500000e-01 : f32
    %78 = vector.broadcast %cst_18 : f32 to vector<1x8x8xf32>
    %79 = arith.mulf %77, %78 : vector<1x8x8xf32>
    %80 = tpu.iota {dimensions = array<i32: 0>} : vector<8x8xi32>
    %81 = tpu.iota {dimensions = array<i32: 1>} : vector<8x8xi32>
    %82 = arith.cmpi eq, %80, %81 : vector<8x8xi32>
    %83 = vector.shape_cast %82 : vector<8x8xi1> to vector<1x8x8xi1>
    %cst_19 = arith.constant 1.000000e+00 : f32
    %84 = vector.broadcast %cst_19 : f32 to vector<1x8x8xf32>
    %85 = arith.select %83, %84, %79 : vector<1x8x8xi1>, vector<1x8x8xf32>
    %c0_20 = arith.constant 0 : index
    %c0_21 = arith.constant 0 : index
    %c0_22 = arith.constant 0 : index
    %86 = vector.load %arg7[%c0_20, %c0_21, %c0_22] : memref<1x8x8xf32, #tpu.memory_space<vmem>>, vector<1x8x8xf32>
    tpu.vector_store %arg7[%c0_20, %c0_21, %c0_22], %85 {strides = array<i32>} : memref<1x8x8xf32, #tpu.memory_space<vmem>>, vector<1x8x8xf32>,
    %cst_23 = arith.constant dense<0.000000e+00> : vector<1x8xf32>
    %87 = vector.multi_reduction <add>, %85, %cst_23 [2] : vector<1x8x8xf32> to vector<1x8xf32>
    %88 = vector.shape_cast %87 : vector<1x8xf32> to vector<1x8x1xf32>
    %cst_24 = arith.constant 1.000000e+00 : f32
    %89 = vector.broadcast %cst_24 : f32 to vector<1x8x1xf32>
    %90 = arith.addf %88, %89 : vector<1x8x1xf32>
    %cst_25 = arith.constant 1.000000e+00 : f32
    %91 = vector.broadcast %cst_25 : f32 to vector<1x8x1xf32>
    %92 = arith.divf %91, %90 : vector<1x8x1xf32>
    %93 = arith.truncf %85 : vector<1x8x8xf32> to vector<1x8x8xbf16>
    "tpu.trace_start"() <{level = 10 : i32, message = "bij,bjd->bid"}> : () -> ()
    %cst_26 = arith.constant dense<0.000000e+00> : vector<1x8x32xf32>
    %94 = tpu.matmul %93, %0, %cst_26 {dimension_numbers = #tpu.dot_dimension_numbers<[2], [1], [1], [2], [0, 0, 0, 1, 1, 2], [0], [0]>} : vector<1x8x8xbf16>, vector<1x8x32xbf16>, vector<1x8x32xf32> -> vector<1x8x32xf32>
    "tpu.trace_stop"() : () -> ()
    %95 = vector.shape_cast %94 : vector<1x8x32xf32> to vector<8x32xf32>
    %96 = arith.truncf %95 : vector<8x32xf32> to vector<8x32xbf16>
    %c0_27 = arith.constant 0 : index
    %c0_28 = arith.constant 0 : index
    %c0_29 = arith.constant 0 : index
    %97 = vector.load %arg4[%c0_27, %c0_28, %c0_29] : memref<2x32x32xbf16, #tpu.memory_space<vmem>>, vector<1x32x32xbf16>
    %98 = vector.shape_cast %97 : vector<1x32x32xbf16> to vector<32x32xbf16>
    %cst_30 = arith.constant dense<0.000000e+00> : vector<8x32xf32>
    %99 = tpu.matmul %96, %98, %cst_30 {dimension_numbers = #tpu.dot_dimension_numbers<[1], [0], [0], [1], [0, 0, 1, 1], [], []>} : vector<8x32xbf16>, vector<32x32xbf16>, vector<8x32xf32> -> vector<8x32xf32>
    %c0_31 = arith.constant 0 : index
    %c0_32 = arith.constant 0 : index
    %c0_33 = arith.constant 0 : index
    %100 = vector.load %arg5[%c0_31, %c0_32, %c0_33] : memref<2x1x32xf32, #tpu.memory_space<vmem>>, vector<1x1x32xf32>
    %101 = vector.shape_cast %100 : vector<1x1x32xf32> to vector<1x32xf32>
    %102 = vector.broadcast %101 : vector<1x32xf32> to vector<8x32xf32>
    %103 = arith.addf %99, %102 : vector<8x32xf32>
    %104 = vector.shape_cast %103 : vector<8x32xf32> to vector<1x8x32xf32>
    %105 = vector.broadcast %92 : vector<1x8x1xf32> to vector<1x8x32xf32>
    %106 = arith.mulf %104, %105 : vector<1x8x32xf32>
    %cst_34 = arith.constant 0.000000e+00 : f32
    %107 = vector.broadcast %cst_34 : f32 to vector<1x8x32xf32>
    %108 = arith.maximumf %106, %107 : vector<1x8x32xf32>
    %109 = arith.truncf %108 : vector<1x8x32xf32> to vector<1x8x32xbf16>
    "tpu.trace_start"() <{level = 10 : i32, message = "bij,bjd->bid"}> : () -> ()
    %cst_35 = arith.constant dense<0.000000e+00> : vector<1x8x32xf32>
    %110 = tpu.matmul %93, %109, %cst_35 {dimension_numbers = #tpu.dot_dimension_numbers<[2], [1], [1], [2], [0, 0, 0, 1, 1, 2], [0], [0]>} : vector<1x8x8xbf16>, vector<1x8x32xbf16>, vector<1x8x32xf32> -> vector<1x8x32xf32>
    "tpu.trace_stop"() : () -> ()
    %111 = vector.shape_cast %110 : vector<1x8x32xf32> to vector<8x32xf32>
    %112 = arith.truncf %111 : vector<8x32xf32> to vector<8x32xbf16>
    %c1 = arith.constant 1 : index
    %c0_36 = arith.constant 0 : index
    %c0_37 = arith.constant 0 : index
    %113 = vector.load %arg4[%c1, %c0_36, %c0_37] : memref<2x32x32xbf16, #tpu.memory_space<vmem>>, vector<1x32x32xbf16>
    %114 = vector.shape_cast %113 : vector<1x32x32xbf16> to vector<32x32xbf16>
    %cst_38 = arith.constant dense<0.000000e+00> : vector<8x32xf32>
    %115 = tpu.matmul %112, %114, %cst_38 {dimension_numbers = #tpu.dot_dimension_numbers<[1], [0], [0], [1], [0, 0, 1, 1], [], []>} : vector<8x32xbf16>, vector<32x32xbf16>, vector<8x32xf32> -> vector<8x32xf32>
    %c1_39 = arith.constant 1 : index
    %c0_40 = arith.constant 0 : index
    %c0_41 = arith.constant 0 : index
    %116 = vector.load %arg5[%c1_39, %c0_40, %c0_41] : memref<2x1x32xf32, #tpu.memory_space<vmem>>, vector<1x1x32xf32>
    %117 = vector.shape_cast %116 : vector<1x1x32xf32> to vector<1x32xf32>
    %118 = vector.broadcast %117 : vector<1x32xf32> to vector<8x32xf32>
    %119 = arith.addf %115, %118 : vector<8x32xf32>
    %120 = vector.shape_cast %119 : vector<8x32xf32> to vector<1x8x32xf32>
    %121 = vector.broadcast %92 : vector<1x8x1xf32> to vector<1x8x32xf32>
    %122 = arith.mulf %120, %121 : vector<1x8x32xf32>
    %cst_42 = arith.constant 0.000000e+00 : f32
    %123 = vector.broadcast %cst_42 : f32 to vector<1x8x32xf32>
    %124 = arith.maximumf %122, %123 : vector<1x8x32xf32>
    %c0_43 = arith.constant 0 : index
    %c0_44 = arith.constant 0 : index
    %c0_45 = arith.constant 0 : index
    %125 = vector.load %arg6[%c0_43, %c0_44, %c0_45] : memref<1x8x32xf32, #tpu.memory_space<vmem>>, vector<1x8x32xf32>
    tpu.vector_store %arg6[%c0_43, %c0_44, %c0_45], %124 {strides = array<i32>} : memref<1x8x32xf32, #tpu.memory_space<vmem>>, vector<1x8x32xf32>,
    return
  }
  func.func @transform_0(%arg0: i32) -> (i32, i32, i32) {
    %c0_i32 = arith.constant 0 : i32
    %c0_i32_0 = arith.constant 0 : i32
    %c0_i32_1 = arith.constant 0 : i32
    return %arg0, %c0_i32, %c0_i32_0 : i32, i32, i32
  }
  func.func @transform_1(%arg0: i32) -> (i32, i32) {
    %c0_i32 = arith.constant 0 : i32
    %c0_i32_0 = arith.constant 0 : i32
    %c0_i32_1 = arith.constant 0 : i32
    return %c0_i32, %c0_i32_0 : i32, i32
  }
  func.func @transform_2(%arg0: i32) -> (i32, i32) {
    %c0_i32 = arith.constant 0 : i32
    %c0_i32_0 = arith.constant 0 : i32
    %c0_i32_1 = arith.constant 0 : i32
    return %c0_i32, %c0_i32_0 : i32, i32
  }
  func.func @transform_3(%arg0: i32) -> (i32, i32, i32) {
    %c0_i32 = arith.constant 0 : i32
    %c0_i32_0 = arith.constant 0 : i32
    %c0_i32_1 = arith.constant 0 : i32
    %c0_i32_2 = arith.constant 0 : i32
    return %c0_i32, %c0_i32_0, %c0_i32_1 : i32, i32, i32
  }
  func.func @transform_4(%arg0: i32) -> (i32, i32, i32) {
    %c0_i32 = arith.constant 0 : i32
    %c0_i32_0 = arith.constant 0 : i32
    %c0_i32_1 = arith.constant 0 : i32
    %c0_i32_2 = arith.constant 0 : i32
    return %c0_i32, %c0_i32_0, %c0_i32_1 : i32, i32, i32
  }
  func.func @transform_5(%arg0: i32) -> (i32, i32, i32) {
    %c0_i32 = arith.constant 0 : i32
    %c0_i32_0 = arith.constant 0 : i32
    %c0_i32_1 = arith.constant 0 : i32
    return %arg0, %c0_i32, %c0_i32_0 : i32, i32, i32
  }
  func.func @transform_6(%arg0: i32) -> (i32, i32, i32) {
    %c0_i32 = arith.constant 0 : i32
    %c0_i32_0 = arith.constant 0 : i32
    %c0_i32_1 = arith.constant 0 : i32
    return %arg0, %c0_i32, %c0_i32_0 : i32, i32, i32
  }
}

module attributes {stable_mosaic.version = 11 : i64} {
  func.func @_fused_gcn_kernel(%arg0: i32, %arg1: memref<1x8x32xbf16, #tpu.memory_space<vmem>>, %arg2: memref<32x64xbf16, #tpu.memory_space<vmem>>, %arg3: memref<1x64xf32, #tpu.memory_space<vmem>>, %arg4: memref<2x32x32xbf16, #tpu.memory_space<vmem>>, %arg5: memref<2x1x32xf32, #tpu.memory_space<vmem>>, %arg6: memref<1x8x32xf32, #tpu.memory_space<vmem>>, %arg7: memref<1x8x8xf32, #tpu.memory_space<vmem>>) attributes {dimension_semantics = [#tpu.dimension_semantics<parallel>], iteration_bounds = array<i64: 2>, scalar_prefetch = 0 : i64, scratch_operands = 0 : i64, tpu.core_type = #tpu.core_type<tc>, window_params = [{transform_indices = @transform_0, window_bounds = array<i64: 1, 8, 32>}, {pipeline_mode = #tpu.pipeline_mode<synchronous>, transform_indices = @transform_1, window_bounds = array<i64: 32, 64>}, {pipeline_mode = #tpu.pipeline_mode<synchronous>, transform_indices = @transform_2, window_bounds = array<i64: 1, 64>}, {pipeline_mode = #tpu.pipeline_mode<synchronous>, transform_indices = @transform_3, window_bounds = array<i64: 2, 32, 32>}, {pipeline_mode = #tpu.pipeline_mode<synchronous>, transform_indices = @transform_4, window_bounds = array<i64: 2, 1, 32>}, {transform_indices = @transform_5, window_bounds = array<i64: 1, 8, 32>}, {transform_indices = @transform_6, window_bounds = array<i64: 1, 8, 8>}]} {
    %c0 = arith.constant 0 : index
    %c0_0 = arith.constant 0 : index
    %c0_1 = arith.constant 0 : index
    %0 = vector.load %arg1[%c0, %c0_0, %c0_1] : memref<1x8x32xbf16, #tpu.memory_space<vmem>>, vector<1x8x32xbf16>
    %1 = vector.shape_cast %0 : vector<1x8x32xbf16> to vector<8x32xbf16>
    %c0_2 = arith.constant 0 : index
    %c0_3 = arith.constant 0 : index
    %2 = vector.load %arg2[%c0_2, %c0_3] : memref<32x64xbf16, #tpu.memory_space<vmem>>, vector<32x64xbf16>
    %cst = arith.constant dense<0.000000e+00> : vector<8x64xf32>
    %3 = tpu.matmul %1, %2, %cst {dimension_numbers = #tpu.dot_dimension_numbers<[1], [0], [0], [1], [0, 0, 1, 1], [], []>} : vector<8x32xbf16>, vector<32x64xbf16>, vector<8x64xf32> -> vector<8x64xf32>
    %c0_4 = arith.constant 0 : index
    %c0_5 = arith.constant 0 : index
    %4 = vector.load %arg3[%c0_4, %c0_5] : memref<1x64xf32, #tpu.memory_space<vmem>>, vector<1x64xf32>
    %5 = vector.broadcast %4 : vector<1x64xf32> to vector<8x64xf32>
    %6 = arith.addf %3, %5 : vector<8x64xf32>
    %7 = vector.extract_strided_slice %6 {offsets = [0, 0], sizes = [8, 8], strides = [1, 1]} : vector<8x64xf32> to vector<8x8xf32>
    %8 = vector.shape_cast %7 : vector<8x8xf32> to vector<1x8x8xf32>
    %9 = vector.extract_strided_slice %6 {offsets = [0, 32], sizes = [8, 8], strides = [1, 1]} : vector<8x64xf32> to vector<8x8xf32>
    %10 = vector.shape_cast %9 : vector<8x8xf32> to vector<1x8x8xf32>
    %11 = arith.truncf %8 : vector<1x8x8xf32> to vector<1x8x8xbf16>
    %12 = arith.truncf %10 : vector<1x8x8xf32> to vector<1x8x8xbf16>
    "tpu.trace_start"() <{level = 10 : i32, message = "bqd,bkd->bqk"}> : () -> ()
    %cst_6 = arith.constant dense<0.000000e+00> : vector<1x8x8xf32>
    %13 = tpu.matmul %11, %12, %cst_6 {dimension_numbers = #tpu.dot_dimension_numbers<[2], [2], [1], [1], [0, 0, 0, 1, 1, 1], [0], [0]>} : vector<1x8x8xbf16>, vector<1x8x8xbf16>, vector<1x8x8xf32> -> vector<1x8x8xf32>
    "tpu.trace_stop"() : () -> ()
    %cst_7 = arith.constant dense<0xFF800000> : vector<1x8xf32>
    %14 = vector.multi_reduction <maximumf>, %13, %cst_7 [2] : vector<1x8x8xf32> to vector<1x8xf32>
    %15 = vector.shape_cast %14 : vector<1x8xf32> to vector<1x8x1xf32>
    %16 = vector.broadcast %15 : vector<1x8x1xf32> to vector<1x8x8xf32>
    %17 = arith.subf %13, %16 : vector<1x8x8xf32>
    %18 = math.exp %17 : vector<1x8x8xf32>
    %cst_8 = arith.constant dense<0.000000e+00> : vector<1x8xf32>
    %19 = vector.multi_reduction <add>, %18, %cst_8 [2] : vector<1x8x8xf32> to vector<1x8xf32>
    %20 = vector.shape_cast %19 : vector<1x8xf32> to vector<1x8x1xf32>
    %21 = tpu.reciprocal %20 {approx = true} : vector<1x8x1xf32> -> vector<1x8x1xf32>
    %22 = vector.broadcast %21 : vector<1x8x1xf32> to vector<1x8x8xf32>
    %23 = arith.mulf %18, %22 : vector<1x8x8xf32>
    %24 = vector.extract_strided_slice %6 {offsets = [0, 8], sizes = [8, 8], strides = [1, 1]} : vector<8x64xf32> to vector<8x8xf32>
    %25 = vector.shape_cast %24 : vector<8x8xf32> to vector<1x8x8xf32>
    %26 = vector.extract_strided_slice %6 {offsets = [0, 40], sizes = [8, 8], strides = [1, 1]} : vector<8x64xf32> to vector<8x8xf32>
    %27 = vector.shape_cast %26 : vector<8x8xf32> to vector<1x8x8xf32>
    %28 = arith.truncf %25 : vector<1x8x8xf32> to vector<1x8x8xbf16>
    %29 = arith.truncf %27 : vector<1x8x8xf32> to vector<1x8x8xbf16>
    "tpu.trace_start"() <{level = 10 : i32, message = "bqd,bkd->bqk"}> : () -> ()
    %cst_9 = arith.constant dense<0.000000e+00> : vector<1x8x8xf32>
    %30 = tpu.matmul %28, %29, %cst_9 {dimension_numbers = #tpu.dot_dimension_numbers<[2], [2], [1], [1], [0, 0, 0, 1, 1, 1], [0], [0]>} : vector<1x8x8xbf16>, vector<1x8x8xbf16>, vector<1x8x8xf32> -> vector<1x8x8xf32>
    "tpu.trace_stop"() : () -> ()
    %cst_10 = arith.constant dense<0xFF800000> : vector<1x8xf32>
    %31 = vector.multi_reduction <maximumf>, %30, %cst_10 [2] : vector<1x8x8xf32> to vector<1x8xf32>
    %32 = vector.shape_cast %31 : vector<1x8xf32> to vector<1x8x1xf32>
    %33 = vector.broadcast %32 : vector<1x8x1xf32> to vector<1x8x8xf32>
    %34 = arith.subf %30, %33 : vector<1x8x8xf32>
    %35 = math.exp %34 : vector<1x8x8xf32>
    %cst_11 = arith.constant dense<0.000000e+00> : vector<1x8xf32>
    %36 = vector.multi_reduction <add>, %35, %cst_11 [2] : vector<1x8x8xf32> to vector<1x8xf32>
    %37 = vector.shape_cast %36 : vector<1x8xf32> to vector<1x8x1xf32>
    %38 = tpu.reciprocal %37 {approx = true} : vector<1x8x1xf32> -> vector<1x8x1xf32>
    %39 = vector.broadcast %38 : vector<1x8x1xf32> to vector<1x8x8xf32>
    %40 = arith.mulf %35, %39 : vector<1x8x8xf32>
    %41 = arith.addf %23, %40 : vector<1x8x8xf32>
    %42 = vector.extract_strided_slice %6 {offsets = [0, 16], sizes = [8, 8], strides = [1, 1]} : vector<8x64xf32> to vector<8x8xf32>
    %43 = vector.shape_cast %42 : vector<8x8xf32> to vector<1x8x8xf32>
    %44 = vector.extract_strided_slice %6 {offsets = [0, 48], sizes = [8, 8], strides = [1, 1]} : vector<8x64xf32> to vector<8x8xf32>
    %45 = vector.shape_cast %44 : vector<8x8xf32> to vector<1x8x8xf32>
    %46 = arith.truncf %43 : vector<1x8x8xf32> to vector<1x8x8xbf16>
    %47 = arith.truncf %45 : vector<1x8x8xf32> to vector<1x8x8xbf16>
    "tpu.trace_start"() <{level = 10 : i32, message = "bqd,bkd->bqk"}> : () -> ()
    %cst_12 = arith.constant dense<0.000000e+00> : vector<1x8x8xf32>
    %48 = tpu.matmul %46, %47, %cst_12 {dimension_numbers = #tpu.dot_dimension_numbers<[2], [2], [1], [1], [0, 0, 0, 1, 1, 1], [0], [0]>} : vector<1x8x8xbf16>, vector<1x8x8xbf16>, vector<1x8x8xf32> -> vector<1x8x8xf32>
    "tpu.trace_stop"() : () -> ()
    %cst_13 = arith.constant dense<0xFF800000> : vector<1x8xf32>
    %49 = vector.multi_reduction <maximumf>, %48, %cst_13 [2] : vector<1x8x8xf32> to vector<1x8xf32>
    %50 = vector.shape_cast %49 : vector<1x8xf32> to vector<1x8x1xf32>
    %51 = vector.broadcast %50 : vector<1x8x1xf32> to vector<1x8x8xf32>
    %52 = arith.subf %48, %51 : vector<1x8x8xf32>
    %53 = math.exp %52 : vector<1x8x8xf32>
    %cst_14 = arith.constant dense<0.000000e+00> : vector<1x8xf32>
    %54 = vector.multi_reduction <add>, %53, %cst_14 [2] : vector<1x8x8xf32> to vector<1x8xf32>
    %55 = vector.shape_cast %54 : vector<1x8xf32> to vector<1x8x1xf32>
    %56 = tpu.reciprocal %55 {approx = true} : vector<1x8x1xf32> -> vector<1x8x1xf32>
    %57 = vector.broadcast %56 : vector<1x8x1xf32> to vector<1x8x8xf32>
    %58 = arith.mulf %53, %57 : vector<1x8x8xf32>
    %59 = arith.addf %41, %58 : vector<1x8x8xf32>
    %60 = vector.extract_strided_slice %6 {offsets = [0, 24], sizes = [8, 8], strides = [1, 1]} : vector<8x64xf32> to vector<8x8xf32>
    %61 = vector.shape_cast %60 : vector<8x8xf32> to vector<1x8x8xf32>
    %62 = vector.extract_strided_slice %6 {offsets = [0, 56], sizes = [8, 8], strides = [1, 1]} : vector<8x64xf32> to vector<8x8xf32>
    %63 = vector.shape_cast %62 : vector<8x8xf32> to vector<1x8x8xf32>
    %64 = arith.truncf %61 : vector<1x8x8xf32> to vector<1x8x8xbf16>
    %65 = arith.truncf %63 : vector<1x8x8xf32> to vector<1x8x8xbf16>
    "tpu.trace_start"() <{level = 10 : i32, message = "bqd,bkd->bqk"}> : () -> ()
    %cst_15 = arith.constant dense<0.000000e+00> : vector<1x8x8xf32>
    %66 = tpu.matmul %64, %65, %cst_15 {dimension_numbers = #tpu.dot_dimension_numbers<[2], [2], [1], [1], [0, 0, 0, 1, 1, 1], [0], [0]>} : vector<1x8x8xbf16>, vector<1x8x8xbf16>, vector<1x8x8xf32> -> vector<1x8x8xf32>
    "tpu.trace_stop"() : () -> ()
    %cst_16 = arith.constant dense<0xFF800000> : vector<1x8xf32>
    %67 = vector.multi_reduction <maximumf>, %66, %cst_16 [2] : vector<1x8x8xf32> to vector<1x8xf32>
    %68 = vector.shape_cast %67 : vector<1x8xf32> to vector<1x8x1xf32>
    %69 = vector.broadcast %68 : vector<1x8x1xf32> to vector<1x8x8xf32>
    %70 = arith.subf %66, %69 : vector<1x8x8xf32>
    %71 = math.exp %70 : vector<1x8x8xf32>
    %cst_17 = arith.constant dense<0.000000e+00> : vector<1x8xf32>
    %72 = vector.multi_reduction <add>, %71, %cst_17 [2] : vector<1x8x8xf32> to vector<1x8xf32>
    %73 = vector.shape_cast %72 : vector<1x8xf32> to vector<1x8x1xf32>
    %74 = tpu.reciprocal %73 {approx = true} : vector<1x8x1xf32> -> vector<1x8x1xf32>
    %75 = vector.broadcast %74 : vector<1x8x1xf32> to vector<1x8x8xf32>
    %76 = arith.mulf %71, %75 : vector<1x8x8xf32>
    %77 = arith.addf %59, %76 : vector<1x8x8xf32>
    %cst_18 = arith.constant 2.500000e-01 : f32
    %78 = vector.broadcast %cst_18 : f32 to vector<1x8x8xf32>
    %79 = arith.mulf %77, %78 : vector<1x8x8xf32>
    %80 = tpu.iota {dimensions = array<i32: 0>} : vector<8x8xi32>
    %81 = tpu.iota {dimensions = array<i32: 1>} : vector<8x8xi32>
    %82 = arith.cmpi eq, %80, %81 : vector<8x8xi32>
    %83 = vector.shape_cast %82 : vector<8x8xi1> to vector<1x8x8xi1>
    %cst_19 = arith.constant 1.000000e+00 : f32
    %84 = vector.broadcast %cst_19 : f32 to vector<1x8x8xf32>
    %85 = arith.select %83, %84, %79 : vector<1x8x8xi1>, vector<1x8x8xf32>
    %c0_20 = arith.constant 0 : index
    %c0_21 = arith.constant 0 : index
    %c0_22 = arith.constant 0 : index
    %86 = vector.load %arg7[%c0_20, %c0_21, %c0_22] : memref<1x8x8xf32, #tpu.memory_space<vmem>>, vector<1x8x8xf32>
    tpu.vector_store %arg7[%c0_20, %c0_21, %c0_22], %85 {strides = array<i32>} : memref<1x8x8xf32, #tpu.memory_space<vmem>>, vector<1x8x8xf32>,
    %cst_23 = arith.constant dense<0.000000e+00> : vector<1x8xf32>
    %87 = vector.multi_reduction <add>, %85, %cst_23 [2] : vector<1x8x8xf32> to vector<1x8xf32>
    %88 = vector.shape_cast %87 : vector<1x8xf32> to vector<1x8x1xf32>
    %cst_24 = arith.constant 1.000000e+00 : f32
    %89 = vector.broadcast %cst_24 : f32 to vector<1x8x1xf32>
    %90 = arith.addf %88, %89 : vector<1x8x1xf32>
    %cst_25 = arith.constant 1.000000e+00 : f32
    %91 = vector.broadcast %cst_25 : f32 to vector<1x8x1xf32>
    %92 = arith.divf %91, %90 : vector<1x8x1xf32>
    %93 = arith.truncf %85 : vector<1x8x8xf32> to vector<1x8x8xbf16>
    "tpu.trace_start"() <{level = 10 : i32, message = "bij,bjd->bid"}> : () -> ()
    %cst_26 = arith.constant dense<0.000000e+00> : vector<1x8x32xf32>
    %94 = tpu.matmul %93, %0, %cst_26 {dimension_numbers = #tpu.dot_dimension_numbers<[2], [1], [1], [2], [0, 0, 0, 1, 1, 2], [0], [0]>} : vector<1x8x8xbf16>, vector<1x8x32xbf16>, vector<1x8x32xf32> -> vector<1x8x32xf32>
    "tpu.trace_stop"() : () -> ()
    %95 = vector.shape_cast %94 : vector<1x8x32xf32> to vector<8x32xf32>
    %96 = arith.truncf %95 : vector<8x32xf32> to vector<8x32xbf16>
    %c0_27 = arith.constant 0 : index
    %c0_28 = arith.constant 0 : index
    %c0_29 = arith.constant 0 : index
    %97 = vector.load %arg4[%c0_27, %c0_28, %c0_29] : memref<2x32x32xbf16, #tpu.memory_space<vmem>>, vector<1x32x32xbf16>
    %98 = vector.shape_cast %97 : vector<1x32x32xbf16> to vector<32x32xbf16>
    %cst_30 = arith.constant dense<0.000000e+00> : vector<8x32xf32>
    %99 = tpu.matmul %96, %98, %cst_30 {dimension_numbers = #tpu.dot_dimension_numbers<[1], [0], [0], [1], [0, 0, 1, 1], [], []>} : vector<8x32xbf16>, vector<32x32xbf16>, vector<8x32xf32> -> vector<8x32xf32>
    %c0_31 = arith.constant 0 : index
    %c0_32 = arith.constant 0 : index
    %c0_33 = arith.constant 0 : index
    %100 = vector.load %arg5[%c0_31, %c0_32, %c0_33] : memref<2x1x32xf32, #tpu.memory_space<vmem>>, vector<1x1x32xf32>
    %101 = vector.shape_cast %100 : vector<1x1x32xf32> to vector<1x32xf32>
    %102 = vector.broadcast %101 : vector<1x32xf32> to vector<8x32xf32>
    %103 = arith.addf %99, %102 : vector<8x32xf32>
    %104 = vector.shape_cast %103 : vector<8x32xf32> to vector<1x8x32xf32>
    %105 = vector.broadcast %92 : vector<1x8x1xf32> to vector<1x8x32xf32>
    %106 = arith.mulf %104, %105 : vector<1x8x32xf32>
    %cst_34 = arith.constant 0.000000e+00 : f32
    %107 = vector.broadcast %cst_34 : f32 to vector<1x8x32xf32>
    %108 = arith.maximumf %106, %107 : vector<1x8x32xf32>
    %109 = arith.truncf %108 : vector<1x8x32xf32> to vector<1x8x32xbf16>
    "tpu.trace_start"() <{level = 10 : i32, message = "bij,bjd->bid"}> : () -> ()
    %cst_35 = arith.constant dense<0.000000e+00> : vector<1x8x32xf32>
    %110 = tpu.matmul %93, %109, %cst_35 {dimension_numbers = #tpu.dot_dimension_numbers<[2], [1], [1], [2], [0, 0, 0, 1, 1, 2], [0], [0]>} : vector<1x8x8xbf16>, vector<1x8x32xbf16>, vector<1x8x32xf32> -> vector<1x8x32xf32>
    "tpu.trace_stop"() : () -> ()
    %111 = vector.shape_cast %110 : vector<1x8x32xf32> to vector<8x32xf32>
    %112 = arith.truncf %111 : vector<8x32xf32> to vector<8x32xbf16>
    %c1 = arith.constant 1 : index
    %c0_36 = arith.constant 0 : index
    %c0_37 = arith.constant 0 : index
    %113 = vector.load %arg4[%c1, %c0_36, %c0_37] : memref<2x32x32xbf16, #tpu.memory_space<vmem>>, vector<1x32x32xbf16>
    %114 = vector.shape_cast %113 : vector<1x32x32xbf16> to vector<32x32xbf16>
    %cst_38 = arith.constant dense<0.000000e+00> : vector<8x32xf32>
    %115 = tpu.matmul %112, %114, %cst_38 {dimension_numbers = #tpu.dot_dimension_numbers<[1], [0], [0], [1], [0, 0, 1, 1], [], []>} : vector<8x32xbf16>, vector<32x32xbf16>, vector<8x32xf32> -> vector<8x32xf32>
    %c1_39 = arith.constant 1 : index
    %c0_40 = arith.constant 0 : index
    %c0_41 = arith.constant 0 : index
    %116 = vector.load %arg5[%c1_39, %c0_40, %c0_41] : memref<2x1x32xf32, #tpu.memory_space<vmem>>, vector<1x1x32xf32>
    %117 = vector.shape_cast %116 : vector<1x1x32xf32> to vector<1x32xf32>
    %118 = vector.broadcast %117 : vector<1x32xf32> to vector<8x32xf32>
    %119 = arith.addf %115, %118 : vector<8x32xf32>
    %120 = vector.shape_cast %119 : vector<8x32xf32> to vector<1x8x32xf32>
    %121 = vector.broadcast %92 : vector<1x8x1xf32> to vector<1x8x32xf32>
    %122 = arith.mulf %120, %121 : vector<1x8x32xf32>
    %cst_42 = arith.constant 0.000000e+00 : f32
    %123 = vector.broadcast %cst_42 : f32 to vector<1x8x32xf32>
    %124 = arith.maximumf %122, %123 : vector<1x8x32xf32>
    %c0_43 = arith.constant 0 : index
    %c0_44 = arith.constant 0 : index
    %c0_45 = arith.constant 0 : index
    %125 = vector.load %arg6[%c0_43, %c0_44, %c0_45] : memref<1x8x32xf32, #tpu.memory_space<vmem>>, vector<1x8x32xf32>
    tpu.vector_store %arg6[%c0_43, %c0_44, %c0_45], %124 {strides = array<i32>} : memref<1x8x32xf32, #tpu.memory_space<vmem>>, vector<1x8x32xf32>,
    return
  }
  func.func @transform_0(%arg0: i32) -> (i32, i32, i32) {
    %c0_i32 = arith.constant 0 : i32
    %c0_i32_0 = arith.constant 0 : i32
    %c0_i32_1 = arith.constant 0 : i32
    return %arg0, %c0_i32, %c0_i32_0 : i32, i32, i32
  }
  func.func @transform_1(%arg0: i32) -> (i32, i32) {
    %c0_i32 = arith.constant 0 : i32
    %c0_i32_0 = arith.constant 0 : i32
    %c0_i32_1 = arith.constant 0 : i32
    return %c0_i32, %c0_i32_0 : i32, i32
  }
  func.func @transform_2(%arg0: i32) -> (i32, i32) {
    %c0_i32 = arith.constant 0 : i32
    %c0_i32_0 = arith.constant 0 : i32
    %c0_i32_1 = arith.constant 0 : i32
    return %c0_i32, %c0_i32_0 : i32, i32
  }
  func.func @transform_3(%arg0: i32) -> (i32, i32, i32) {
    %c0_i32 = arith.constant 0 : i32
    %c0_i32_0 = arith.constant 0 : i32
    %c0_i32_1 = arith.constant 0 : i32
    %c0_i32_2 = arith.constant 0 : i32
    return %c0_i32, %c0_i32_0, %c0_i32_1 : i32, i32, i32
  }
  func.func @transform_4(%arg0: i32) -> (i32, i32, i32) {
    %c0_i32 = arith.constant 0 : i32
    %c0_i32_0 = arith.constant 0 : i32
    %c0_i32_1 = arith.constant 0 : i32
    %c0_i32_2 = arith.constant 0 : i32
    return %c0_i32, %c0_i32_0, %c0_i32_1 : i32, i32, i32
  }
  func.func @transform_5(%arg0: i32) -> (i32, i32, i32) {
    %c0_i32 = arith.constant 0 : i32
    %c0_i32_0 = arith.constant 0 : i32
    %c0_i32_1 = arith.constant 0 : i32
    return %arg0, %c0_i32, %c0_i32_0 : i32, i32, i32
  }
  func.func @transform_6(%arg0: i32) -> (i32, i32, i32) {
    %c0_i32 = arith.constant 0 : i32
    %c0_i32_0 = arith.constant 0 : i32
    %c0_i32_1 = arith.constant 0 : i32
    return %arg0, %c0_i32, %c0_i32_0 : i32, i32, i32
  }
}

</mosaic_0001>

<llo_original>
// kernel: tpu_custom_call.1
$region0: #{tpu_custom_call.1}
  #allocation0 [shape = 'u32[]', space=smem, size = 0x4, offset = 0x4, fixed_abs, tag = 'smem constant byte address 0x4 - core index']
  #allocation1 [shape = 'u32[144,128]{1,0:T(1,128)}', space=vmem, size = 0x12000, scoped, tag = 'internal scratch']
  %s0 = inlined_call_operand.hbm [shape: bf16[2,8,32], index: 0, kind: input, shape index: {}]
  %s1 = inlined_call_operand.hbm [shape: bf16[32,64], index: 1, kind: input, shape index: {}]
  %s2 = inlined_call_operand.vmem [shape: f32[1,64], index: 2, kind: input, shape index: {}]
  %s3 = inlined_call_operand.hbm [shape: bf16[2,32,32], index: 3, kind: input, shape index: {}]
  %s4 = inlined_call_operand.vmem [shape: f32[2,1,32], index: 4, kind: input, shape index: {}]
  %s5 = inlined_call_operand.hbm [shape: f32[2,8,32], index: 5, kind: output, shape index: {0}]
  %s6 = inlined_call_operand.hbm [shape: f32[2,8,8], index: 6, kind: output, shape index: {1}]
  %7 = xla_tuple %s5, %s6
  %s8 = sld [smem:[#allocation0]]
  $region73: #{tpu_custom_call.1} parent=0
    _
  %s10 = ssub.s32 1, %s8
  %s11 = scalar_select 0, %s10, %s8
  $region1: #{tpu_custom_call.1} parent=0
    #allocation2 [shape = 'u8[4096]{0}', space=vmem, size = 0x1000, scoped, tag = 'input window, operand 0']
    #allocation3 [shape = 's32[2]{0}', space=sflag, size = 0x8, scoped, tag = 'scoped memory for tpu_custom_call.1']
    #allocation4 [shape = 's32[2]{0}', space=sflag, size = 0x8, scoped, tag = 'scoped memory for tpu_custom_call.1']
    #allocation5 [shape = 'u8[8192]{0}', space=vmem, size = 0x2000, scoped, tag = 'input window, operand 1, single buffered']
    #allocation6 [shape = 's32[1]{0}', space=sflag, size = 0x4, scoped, tag = 'scoped memory for tpu_custom_call.1']
    #allocation7 [shape = 'u8[16384]{0}', space=vmem, size = 0x4000, scoped, tag = 'input window, operand 3, single buffered']
    #allocation8 [shape = 'u8[8192]{0}', space=vmem, size = 0x2000, scoped, tag = 'output window, operand 0']
    #allocation9 [shape = 'u8[8192]{0}', space=vmem, size = 0x2000, scoped, tag = 'output window, operand 1']
    #allocation10 [shape = 's32[2]{0}', space=sflag, size = 0x8, scoped, tag = 'scoped memory for tpu_custom_call.1']
    %12 = vsyncpa [#allocation3], 0
    %s13 = scalar_lea.sflag [#allocation3], 1
    %14 = vsyncpa %s13, 0
    %15 = vsyncpa [#allocation6], 0
    %16 = vsyncpa [#allocation4], 0
    %s17 = scalar_lea.sflag [#allocation4], 1
    %18 = vsyncpa %s17, 0
    %19 = vsyncpa [#allocation10], 0
    %s20 = scalar_lea.sflag [#allocation10], 1
    %21 = vsyncpa %s20, 0
    loop: start=0, step=1, limit=4
    $region2: #{tpu_custom_call.1} parent=1 // loop_pre_header
      _
    $region3: #{tpu_custom_call.1} parent=1 // loop_header
      %s23 = sphi 0, %s27
      %p24 = scmp.ge.s32.totalorder %s23, 4
      %s33 = sphi 0, %s35
      %s36 = sphi 0, %s33
      %s37 = sphi 0, %s36
      %s53 = sphi 0, %s37
      %s57 = sphi 0, %s57
      %s59 = sphi 0, %s57
      %s60 = sphi 0, %s59
      %s74 = sphi 0, %s60
      %s78 = sphi 0, %s78
      %s80 = sphi 0, %s78
      %s81 = sphi 0, %s80
      %s95 = sphi 0, %s81
      %s99 = sphi 0, %s99
      %s101 = sphi 0, %s99
      %s102 = sphi 0, %s101
      %s116 = sphi 0, %s102
      %s120 = sphi 0, %s120
      %s122 = sphi 0, %s120
      %s123 = sphi 0, %s122
      %s137 = sphi 0, %s123
      %s143 = sphi 0, %s145
      %s146 = sphi 0, %s143
      %s147 = sphi 0, %s146
      %s163 = sphi 0, %s147
      %s169 = sphi 0, %s171
      %s172 = sphi 0, %s169
      %s173 = sphi 0, %s172
      %s189 = sphi 0, %s173
    $region4: #{tpu_custom_call.1} parent=1 // loop_header_branch
      %26 = sbr.rel (%p24) target = $region8
    $region5: #{tpu_custom_call.1} parent=1 // loop_body
      %s28 = ssub.s32 %s23, 1
      %s29 = ssub.s32 %s23, 2
      %s30 = sadd.s32 %s23, 1
      %s31 = ssub.s32 %s23, %s30
      %p32 = scmp.eq.s32.totalorder %s31, 0
      %s34 = sadd.s32 %s33, 1
      %s35 = scalar_select %p32, %s33, %s34
      %p38 = pneg %p32
      %p39 = scmp.eq.s32.totalorder %s23, 1
      %p40 = por %p38, %p39
      %p41 = scmp.ne.s32.totalorder %s33, %s36
      %p42 = scmp.eq.s32.totalorder %s23, 0
      %p43 = por %p41, %p42
      %p44 = scmp.ne.s32.totalorder %s33, %s36
      %p45 = scmp.eq.s32.totalorder %s28, 1
      %p46 = por %p44, %p45
      %p47 = scmp.ne.s32.totalorder %s36, %s37
      %p48 = scmp.eq.s32.totalorder %s28, 0
      %p49 = por %p47, %p48
      %p50 = scmp.ne.s32.totalorder %s36, %s37
      %p51 = scmp.eq.s32.totalorder %s29, 1
      %p52 = por %p50, %p51
      %p54 = scmp.ne.s32.totalorder %s37, %s53
      %p55 = scmp.eq.s32.totalorder %s29, 0
      %p56 = por %p54, %p55
      %s58 = sadd.s32 %s57, 1
      %p61 = scmp.eq.s32.totalorder %s23, 1
      %p62 = scmp.ne.s32.totalorder %s57, %s59
      %p63 = scmp.eq.s32.totalorder %s23, 0
      %p64 = por %p62, %p63
      %p65 = scmp.ne.s32.totalorder %s57, %s59
      %p66 = scmp.eq.s32.totalorder %s28, 1
      %p67 = por %p65, %p66
      %p68 = scmp.ne.s32.totalorder %s59, %s60
      %p69 = scmp.eq.s32.totalorder %s28, 0
      %p70 = por %p68, %p69
      %p71 = scmp.ne.s32.totalorder %s59, %s60
      %p72 = scmp.eq.s32.totalorder %s29, 1
      %p73 = por %p71, %p72
      %p75 = scmp.ne.s32.totalorder %s60, %s74
      %p76 = scmp.eq.s32.totalorder %s29, 0
      %p77 = por %p75, %p76
      %s79 = sadd.s32 %s78, 1
      %p82 = scmp.eq.s32.totalorder %s23, 1
      %p83 = scmp.ne.s32.totalorder %s78, %s80
      %p84 = scmp.eq.s32.totalorder %s23, 0
      %p85 = por %p83, %p84
      %p86 = scmp.ne.s32.totalorder %s78, %s80
      %p87 = scmp.eq.s32.totalorder %s28, 1
      %p88 = por %p86, %p87
      %p89 = scmp.ne.s32.totalorder %s80, %s81
      %p90 = scmp.eq.s32.totalorder %s28, 0
      %p91 = por %p89, %p90
      %p92 = scmp.ne.s32.totalorder %s80, %s81
      %p93 = scmp.eq.s32.totalorder %s29, 1
      %p94 = por %p92, %p93
      %p96 = scmp.ne.s32.totalorder %s81, %s95
      %p97 = scmp.eq.s32.totalorder %s29, 0
      %p98 = por %p96, %p97
      %s100 = sadd.s32 %s99, 1
      %p103 = scmp.eq.s32.totalorder %s23, 1
      %p104 = scmp.ne.s32.totalorder %s99, %s101
      %p105 = scmp.eq.s32.totalorder %s23, 0
      %p106 = por %p104, %p105
      %p107 = scmp.ne.s32.totalorder %s99, %s101
      %p108 = scmp.eq.s32.totalorder %s28, 1
      %p109 = por %p107, %p108
      %p110 = scmp.ne.s32.totalorder %s101, %s102
      %p111 = scmp.eq.s32.totalorder %s28, 0
      %p112 = por %p110, %p111
      %p113 = scmp.ne.s32.totalorder %s101, %s102
      %p114 = scmp.eq.s32.totalorder %s29, 1
      %p115 = por %p113, %p114
      %p117 = scmp.ne.s32.totalorder %s102, %s116
      %p118 = scmp.eq.s32.totalorder %s29, 0
      %p119 = por %p117, %p118
      %s121 = sadd.s32 %s120, 1
      %p124 = scmp.eq.s32.totalorder %s23, 1
      %p125 = scmp.ne.s32.totalorder %s120, %s122
      %p126 = scmp.eq.s32.totalorder %s23, 0
      %p127 = por %p125, %p126
      %p128 = scmp.ne.s32.totalorder %s120, %s122
      %p129 = scmp.eq.s32.totalorder %s28, 1
      %p130 = por %p128, %p129
      %p131 = scmp.ne.s32.totalorder %s122, %s123
      %p132 = scmp.eq.s32.totalorder %s28, 0
      %p133 = por %p131, %p132
      %p134 = scmp.ne.s32.totalorder %s122, %s123
      %p135 = scmp.eq.s32.totalorder %s29, 1
      %p136 = por %p134, %p135
      %p138 = scmp.ne.s32.totalorder %s123, %s137
      %p139 = scmp.eq.s32.totalorder %s29, 0
      %p140 = por %p138, %p139
      %s141 = ssub.s32 %s23, %s30
      %p142 = scmp.eq.s32.totalorder %s141, 0
      %s144 = sadd.s32 %s143, 1
      %s145 = scalar_select %p142, %s143, %s144
      %p148 = pneg %p142
      %p149 = scmp.eq.s32.totalorder %s23, 1
      %p150 = por %p148, %p149
      %p151 = scmp.ne.s32.totalorder %s143, %s146
      %p152 = scmp.eq.s32.totalorder %s23, 0
      %p153 = por %p151, %p152
      %p154 = scmp.ne.s32.totalorder %s143, %s146
      %p155 = scmp.eq.s32.totalorder %s28, 1
      %p156 = por %p154, %p155
      %p157 = scmp.ne.s32.totalorder %s146, %s147
      %p158 = scmp.eq.s32.totalorder %s28, 0
      %p159 = por %p157, %p158
      %p160 = scmp.ne.s32.totalorder %s146, %s147
      %p161 = scmp.eq.s32.totalorder %s29, 1
      %p162 = por %p160, %p161
      %p164 = scmp.ne.s32.totalorder %s147, %s163
      %p165 = scmp.eq.s32.totalorder %s29, 0
      %p166 = por %p164, %p165
      %s167 = ssub.s32 %s23, %s30
      %p168 = scmp.eq.s32.totalorder %s167, 0
      %s170 = sadd.s32 %s169, 1
      %s171 = scalar_select %p168, %s169, %s170
      %p174 = pneg %p168
      %p175 = scmp.eq.s32.totalorder %s23, 1
      %p176 = por %p174, %p175
      %p177 = scmp.ne.s32.totalorder %s169, %s172
      %p178 = scmp.eq.s32.totalorder %s23, 0
      %p179 = por %p177, %p178
      %p180 = scmp.ne.s32.totalorder %s169, %s172
      %p181 = scmp.eq.s32.totalorder %s28, 1
      %p182 = por %p180, %p181
      %p183 = scmp.ne.s32.totalorder %s172, %s173
      %p184 = scmp.eq.s32.totalorder %s28, 0
      %p185 = por %p183, %p184
      %p186 = scmp.ne.s32.totalorder %s172, %s173
      %p187 = scmp.eq.s32.totalorder %s29, 1
      %p188 = por %p186, %p187
      %p190 = scmp.ne.s32.totalorder %s173, %s189
      %p191 = scmp.eq.s32.totalorder %s29, 0
      %p192 = por %p190, %p191
      %p193 = scmp.le.s32.totalorder 1, %s23
      %p194 = scmp.lt.s32.totalorder %s23, 3
      %p195 = pnand %p193, %p194
      %p196 = pneg %p195
      // Predicated region
      $region9: #{tpu_custom_call.1} parent=5 // pred_check
        _
      $region10: #{tpu_custom_call.1} parent=5 // pred_check_branch
        %198 = sbr.rel (%p195) target = $region12
      $region11: #{tpu_custom_call.1} parent=5 // pred_region
        %s199 = ssub.s32 %s23, 1
        // Predicated region
        $region13: #{tpu_custom_call.1} parent=11 // pred_check
          %p200 = pneg %p70
        $region14: #{tpu_custom_call.1} parent=11 // pred_check_branch
          %202 = sbr.rel (%p200) target = $region16
        $region15: #{tpu_custom_call.1} parent=11 // pred_region
          %s204 = ssub.s32 256, 256
          %205 = vsyncadd [#allocation6], %s204
          %s206 = sshll.u32 [#allocation5], 4
          %s207 = int_to_ptr.vmem [resolvable:$true] %s206
          %212 = dma.hbm_to_vmem [thread:$0]  %s1, 256, %s207, [#allocation6], 64, 64, 4
        $region16: #{tpu_custom_call.1} parent=11 // pred_fallthru
          _
        // Predicated region
        $region17: #{tpu_custom_call.1} parent=11 // pred_check
          %p213 = pneg %p91
        $region18: #{tpu_custom_call.1} parent=11 // pred_check_branch
          %215 = sbr.rel (%p213) target = $region20
        $region19: #{tpu_custom_call.1} parent=11 // pred_region
          _
        $region20: #{tpu_custom_call.1} parent=11 // pred_fallthru
          _
        // Predicated region
        $region21: #{tpu_custom_call.1} parent=11 // pred_check
          %p216 = pneg %p112
        $region22: #{tpu_custom_call.1} parent=11 // pred_check_branch
          %218 = sbr.rel (%p216) target = $region24
        $region23: #{tpu_custom_call.1} parent=11 // pred_region
          %s220 = ssub.s32 512, 512
          %221 = vsyncadd [#allocation6], %s220
          %s222 = sshll.u32 [#allocation7], 4
          %s223 = int_to_ptr.vmem [resolvable:$true] %s222
          %228 = dma.hbm_to_vmem [thread:$0]  %s3, 512, %s223, [#allocation6], 64, 64, 4
        $region24: #{tpu_custom_call.1} parent=11 // pred_fallthru
          _
        // Predicated region
        $region25: #{tpu_custom_call.1} parent=11 // pred_check
          %p229 = pneg %p133
        $region26: #{tpu_custom_call.1} parent=11 // pred_check_branch
          %231 = sbr.rel (%p229) target = $region28
        $region27: #{tpu_custom_call.1} parent=11 // pred_region
          _
        $region28: #{tpu_custom_call.1} parent=11 // pred_fallthru
          _
      $region12: #{tpu_custom_call.1} parent=5 // pred_fallthru
        _
      %p232 = scmp.lt.s32.totalorder %s23, 2
      // Predicated region
      $region29: #{tpu_custom_call.1} parent=5 // pred_check
        %p233 = pneg %p232
      $region30: #{tpu_custom_call.1} parent=5 // pred_check_branch
        %235 = sbr.rel (%p233) target = $region32
      $region31: #{tpu_custom_call.1} parent=5 // pred_region
        // Predicated region
        $region33: #{tpu_custom_call.1} parent=31 // pred_check
          %p236 = pneg %p43
        $region34: #{tpu_custom_call.1} parent=31 // pred_check_branch
          %238 = sbr.rel (%p236) target = $region36
        $region35: #{tpu_custom_call.1} parent=31 // pred_region
          %s239 = sand.u32 %s33, 1
          %s240 = scalar_lea.sflag [#allocation3], %s239
          %s241 = sand.u32 %s33, 1
          %s242 = smul.addr %s241, 4
          %s243 = scalar_lea.vmem [#allocation2], %s242
          %s245 = ssub.s32 64, 64
          %246 = vsyncadd %s240, %s245
          %s247 = smul.addr %s23, 64
          %s248 = scalar_lea.hbm %s0, %s247
          %s250 = sshll.u32 %s243, 4
          %s251 = int_to_ptr.vmem [resolvable:$true] %s250
          %253 = dma.hbm_to_vmem [thread:$0]  %s248, 64, %s251, %s240
        $region36: #{tpu_custom_call.1} parent=31 // pred_fallthru
          _
      $region32: #{tpu_custom_call.1} parent=5 // pred_fallthru
        _
      %p254 = scmp.le.s32.totalorder 1, %s23
      %p255 = scmp.lt.s32.totalorder %s23, 3
      %p256 = pnand %p254, %p255
      %p257 = pneg %p256
      // Predicated region
      $region37: #{tpu_custom_call.1} parent=5 // pred_check
        _
      $region38: #{tpu_custom_call.1} parent=5 // pred_check_branch
        %259 = sbr.rel (%p256) target = $region40
      $region39: #{tpu_custom_call.1} parent=5 // pred_region
        %s260 = ssub.s32 %s23, 1
        %s261 = sand.u32 %s36, 1
        %s262 = scalar_lea.sflag [#allocation3], %s261
        %s263 = sand.u32 %s36, 1
        %s264 = smul.addr %s263, 4
        %s265 = scalar_lea.vmem [#allocation2], %s264
        // Predicated region
        $region41: #{tpu_custom_call.1} parent=39 // pred_check
          %p266 = pneg %p49
        $region42: #{tpu_custom_call.1} parent=39 // pred_check_branch
          %268 = sbr.rel (%p266) target = $region44
        $region43: #{tpu_custom_call.1} parent=39 // pred_region
          %269 = dma.done %s262, 64
        $region44: #{tpu_custom_call.1} parent=39 // pred_fallthru
          _
        // Predicated region
        $region45: #{tpu_custom_call.1} parent=39 // pred_check
          %p270 = pneg %p70
        $region46: #{tpu_custom_call.1} parent=39 // pred_check_branch
          %272 = sbr.rel (%p270) target = $region48
        $region47: #{tpu_custom_call.1} parent=39 // pred_region
          %273 = dma.done [#allocation6], 256
        $region48: #{tpu_custom_call.1} parent=39 // pred_fallthru
          _
        // Predicated region
        $region49: #{tpu_custom_call.1} parent=39 // pred_check
          %p274 = pneg %p112
        $region50: #{tpu_custom_call.1} parent=39 // pred_check_branch
          %276 = sbr.rel (%p274) target = $region52
        $region51: #{tpu_custom_call.1} parent=39 // pred_region
          %277 = dma.done [#allocation6], 512
        $region52: #{tpu_custom_call.1} parent=39 // pred_fallthru
          _
        %s278 = sand.u32 %s36, 1
        %s279 = scalar_lea.sflag [#allocation3], %s278
        %s280 = sand.u32 %s36, 1
        %s281 = smul.addr %s280, 4
        %s282 = scalar_lea.vmem [#allocation2], %s281
        %p283 = pneg %p49
        %p284 = pneg %p46
        %p285 = pneg %p70
        %p286 = pneg %p67
        %p287 = pneg %p91
        %p288 = pneg %p88
        %p289 = pneg %p112
        %p290 = pneg %p109
        %p291 = pneg %p133
        %p292 = pneg %p130
        %p293 = pneg %p159
        %p294 = pneg %p156
        %s295 = sand.u32 %s146, 1
        %s296 = scalar_lea.sflag [#allocation4], %s295
        %s297 = sand.u32 %s146, 1
        %s298 = smul.addr %s297, 8
        %s299 = scalar_lea.vmem [#allocation8], %s298
        %p300 = pneg %p185
        %p301 = pneg %p182
        %s302 = sand.u32 %s172, 1
        %s303 = scalar_lea.sflag [#allocation10], %s302
        %s304 = sand.u32 %s172, 1
        %s305 = smul.addr %s304, 8
        %s306 = scalar_lea.vmem [#allocation9], %s305
        %v308 = vld [vmem:[%s265] sm:$0xf]
        %v309 = vld [vmem:[#allocation5] sm:$0xf]
        %v310 = vld [vmem:[#allocation5 + $0x4] sm:$0xf]
        %v311 = vld [vmem:[#allocation5 + $0x8] sm:$0xf]
        %v312 = vld [vmem:[#allocation5 + $0xc] sm:$0xf]
        %v313 = vld [vmem:[%s2] sm:$0x1]
        %v315 = vlaneseq
        %v316 = vshrl.u32 %v315, 7
        %v317 = vsub.s32 0, %v316
        %v318 = vrot.slane %v313, %v317
        %v324 = vunpack.c.l.b16 %v309
        %v325 = vunpack.c.l.b16 %v310
        %v326 = vunpack.c.l.b16 %v311
        %v327 = vunpack.c.l.b16 %v312
        %v328 = vpack.c.b16 %v325, %v324
        %v329 = vpack.c.b16 %v327, %v326
        %vm332 = vcmask 261120
        %v334 = vsel %vm332, %v308, 0
        %336 = vmatprep.subr.bf16.mxu0 0
        %337 = vmatpush1.bf16.msra.mxu0 %v328
        %338 = vmatprep.subr.bf16.mxu0 0
        %339 = vmatpush1.bf16.msra.mxu0 %v329
        %340 = vmatprep.subr.bf16.mxu0 0
        %341 = vmatpush1.bf16.msra.mxu0 0
        %342 = vmatprep.subr.bf16.mxu0 0
        %343 = vmatpush1.bf16.msra.mxu0 0
        %344 = vmatprep.subr.bf16.mxu0 0
        %345 = vmatpush1.bf16.msra.mxu0 0
        %346 = vmatprep.subr.bf16.mxu0 0
        %347 = vmatpush1.bf16.msra.mxu0 0
        %348 = vmatprep.subr.bf16.mxu0 0
        %349 = vmatpush1.bf16.msra.mxu0 0
        %350 = vmatprep.subr.bf16.mxu0 0
        %351 = vmatpush1.bf16.msra.mxu0 0
        %352 = vmatprep.subr.bf16.mxu0 0
        %353 = vmatpush1.bf16.msra.mxu0 0
        %354 = vmatprep.subr.bf16.mxu0 0
        %355 = vmatpush1.bf16.msra.mxu0 0
        %356 = vmatprep.subr.bf16.mxu0 0
        %357 = vmatpush1.bf16.msra.mxu0 0
        %358 = vmatprep.subr.bf16.mxu0 0
        %359 = vmatpush1.bf16.msra.mxu0 0
        %360 = vmatprep.subr.bf16.mxu0 0
        %361 = vmatpush1.bf16.msra.mxu0 0
        %362 = vmatprep.subr.bf16.mxu0 0
        %363 = vmatpush1.bf16.msra.mxu0 0
        %364 = vmatprep.subr.bf16.mxu0 0
        %365 = vmatpush1.bf16.msra.mxu0 0
        %366 = vmatprep.subr.bf16.mxu0 0
        %367 = vmatpush1.bf16.msra.mxu0 0
        %368 = vmatprep.mubr.bf16.mxu0 0
        %369 = vmatmul.mubr.bf16.gmra.mrb[0].mxu0 %v334
        %v370 = vpop.f32.mrb[0].mxu0
        %v371 = vadd.f32 %v318, %v370
        %v372 = vpop.f32.mrb[0].mxu0
        %v373 = vpop.f32.mrb[0].mxu0
        %v374 = vpop.f32.mrb[0].mxu0
        %375 = vdwg.mxu0
        %v376 = vpack.c.bf16 %v371, %v371
        %378 = vrot.lane.b32.xlu0 %v376, 96
        %v379 = vpop.permute.xlu0 %378
        %vm380 = vcmask 64512
        %v382 = vsel %vm380, %v376, 0
        %v385 = vsel %vm380, %v379, 0
        %387 = vmatprep.subr.bf16.mxu0 0
        %388 = vmatpush1.bf16.xpose.msra.mxu0 %v385
        %389 = vmatprep.subr.bf16.mxu0 0
        %390 = vmatpush1.bf16.xpose.msra.mxu0 0
        %391 = vmatprep.subr.bf16.mxu0 0
        %392 = vmatpush1.bf16.xpose.msra.mxu0 0
        %393 = vmatprep.subr.bf16.mxu0 0
        %394 = vmatpush1.bf16.xpose.msra.mxu0 0
        %395 = vmatprep.subr.bf16.mxu0 0
        %396 = vmatpush1.bf16.xpose.msra.mxu0 0
        %397 = vmatprep.subr.bf16.mxu0 0
        %398 = vmatpush1.bf16.xpose.msra.mxu0 0
        %399 = vmatprep.subr.bf16.mxu0 0
        %400 = vmatpush1.bf16.xpose.msra.mxu0 0
        %401 = vmatprep.subr.bf16.mxu0 0
        %402 = vmatpush1.bf16.xpose.msra.mxu0 0
        %403 = vmatprep.subr.bf16.mxu0 0
        %404 = vmatpush1.bf16.xpose.msra.mxu0 0
        %405 = vmatprep.subr.bf16.mxu0 0
        %406 = vmatpush1.bf16.xpose.msra.mxu0 0
        %407 = vmatprep.subr.bf16.mxu0 0
        %408 = vmatpush1.bf16.xpose.msra.mxu0 0
        %409 = vmatprep.subr.bf16.mxu0 0
        %410 = vmatpush1.bf16.xpose.msra.mxu0 0
        %411 = vmatprep.subr.bf16.mxu0 0
        %412 = vmatpush1.bf16.xpose.msra.mxu0 0
        %413 = vmatprep.subr.bf16.mxu0 0
        %414 = vmatpush1.bf16.xpose.msra.mxu0 0
        %415 = vmatprep.subr.bf16.mxu0 0
        %416 = vmatpush1.bf16.xpose.msra.mxu0 0
        %417 = vmatprep.subr.bf16.mxu0 0
        %418 = vmatpush1.bf16.xpose.msra.mxu0 0
        %419 = vmatprep.mubr.bf16.mxu0 0
        %420 = vmatmul.mubr.bf16.gmra.mrb[0].mxu0 %v382
        %v421 = vpop.f32.mrb[0].mxu0
        %v422 = vadd.f32 0.0, %v421
        %v423 = vpop.f32.mrb[0].mxu0
        %v424 = vpop.f32.mrb[0].mxu0
        %v425 = vpop.f32.mrb[0].mxu0
        %426 = vdwg.mxu0
        %v427 = vsel %vm380, %v422, -inf
        %428 = vmax.xlane.f32.xlu0 %v427
        %v429 = vpop.xlane.xlu0 %428
        %v430 = vsub.f32 %v422, %v429
        %v431 = vmul.f32 %v430, 1.442695
        %v432 = vpow.pop %v431
        %v433 = vsel %vm380, %v432, 0.0
        %434 = vadd.xlane.f32.xlu0 %v433
        %v435 = vpop.xlane.xlu0 %434
        %v436 = vrcp.pop %v435
        %v437 = vmul.f32 %v432, %v436
        %438 = vrot.lane.b32.xlu0 %v376, 120
        %v439 = vpop.permute.xlu0 %438
        %440 = vrot.lane.b32.xlu0 %v376, 88
        %v441 = vpop.permute.xlu0 %440
        %v443 = vsel %vm380, %v439, 0
        %v446 = vsel %vm380, %v441, 0
        %448 = vmatprep.subr.bf16.mxu0 0
        %449 = vmatpush1.bf16.xpose.msra.mxu0 %v446
        %450 = vmatprep.subr.bf16.mxu0 0
        %451 = vmatpush1.bf16.xpose.msra.mxu0 0
        %452 = vmatprep.subr.bf16.mxu0 0
        %453 = vmatpush1.bf16.xpose.msra.mxu0 0
        %454 = vmatprep.subr.bf16.mxu0 0
        %455 = vmatpush1.bf16.xpose.msra.mxu0 0
        %456 = vmatprep.subr.bf16.mxu0 0
        %457 = vmatpush1.bf16.xpose.msra.mxu0 0
        %458 = vmatprep.subr.bf16.mxu0 0
        %459 = vmatpush1.bf16.xpose.msra.mxu0 0
        %460 = vmatprep.subr.bf16.mxu0 0
        %461 = vmatpush1.bf16.xpose.msra.mxu0 0
        %462 = vmatprep.subr.bf16.mxu0 0
        %463 = vmatpush1.bf16.xpose.msra.mxu0 0
        %464 = vmatprep.subr.bf16.mxu0 0
        %465 = vmatpush1.bf16.xpose.msra.mxu0 0
        %466 = vmatprep.subr.bf16.mxu0 0
        %467 = vmatpush1.bf16.xpose.msra.mxu0 0
        %468 = vmatprep.subr.bf16.mxu0 0
        %469 = vmatpush1.bf16.xpose.msra.mxu0 0
        %470 = vmatprep.subr.bf16.mxu0 0
        %471 = vmatpush1.bf16.xpose.msra.mxu0 0
        %472 = vmatprep.subr.bf16.mxu0 0
        %473 = vmatpush1.bf16.xpose.msra.mxu0 0
        %474 = vmatprep.subr.bf16.mxu0 0
        %475 = vmatpush1.bf16.xpose.msra.mxu0 0
        %476 = vmatprep.subr.bf16.mxu0 0
        %477 = vmatpush1.bf16.xpose.msra.mxu0 0
        %478 = vmatprep.subr.bf16.mxu0 0
        %479 = vmatpush1.bf16.xpose.msra.mxu0 0
        %480 = vmatprep.mubr.bf16.mxu0 0
        %481 = vmatmul.mubr.bf16.gmra.mrb[0].mxu0 %v443
        %v482 = vpop.f32.mrb[0].mxu0
        %v483 = vadd.f32 0.0, %v482
        %v484 = vpop.f32.mrb[0].mxu0
        %v485 = vpop.f32.mrb[0].mxu0
        %v486 = vpop.f32.mrb[0].mxu0
        %487 = vdwg.mxu0
        %v488 = vsel %vm380, %v483, -inf
        %489 = vmax.xlane.f32.xlu0 %v488
        %v490 = vpop.xlane.xlu0 %489
        %v491 = vsub.f32 %v483, %v490
        %v492 = vmul.f32 %v491, 1.442695
        %v493 = vpow.pop %v492
        %v494 = vsel %vm380, %v493, 0.0
        %495 = vadd.xlane.f32.xlu0 %v494
        %v496 = vpop.xlane.xlu0 %495
        %v497 = vrcp.pop %v496
        %v498 = vmul.f32 %v493, %v497
        %v499 = vadd.f32 %v437, %v498
        %500 = vrot.lane.b32.xlu0 %v376, 112
        %v501 = vpop.permute.xlu0 %500
        %502 = vrot.lane.b32.xlu0 %v376, 80
        %v503 = vpop.permute.xlu0 %502
        %v505 = vsel %vm380, %v501, 0
        %v508 = vsel %vm380, %v503, 0
        %510 = vmatprep.subr.bf16.mxu0 0
        %511 = vmatpush1.bf16.xpose.msra.mxu0 %v508
        %512 = vmatprep.subr.bf16.mxu0 0
        %513 = vmatpush1.bf16.xpose.msra.mxu0 0
        %514 = vmatprep.subr.bf16.mxu0 0
        %515 = vmatpush1.bf16.xpose.msra.mxu0 0
        %516 = vmatprep.subr.bf16.mxu0 0
        %517 = vmatpush1.bf16.xpose.msra.mxu0 0
        %518 = vmatprep.subr.bf16.mxu0 0
        %519 = vmatpush1.bf16.xpose.msra.mxu0 0
        %520 = vmatprep.subr.bf16.mxu0 0
        %521 = vmatpush1.bf16.xpose.msra.mxu0 0
        %522 = vmatprep.subr.bf16.mxu0 0
        %523 = vmatpush1.bf16.xpose.msra.mxu0 0
        %524 = vmatprep.subr.bf16.mxu0 0
        %525 = vmatpush1.bf16.xpose.msra.mxu0 0
        %526 = vmatprep.subr.bf16.mxu0 0
        %527 = vmatpush1.bf16.xpose.msra.mxu0 0
        %528 = vmatprep.subr.bf16.mxu0 0
        %529 = vmatpush1.bf16.xpose.msra.mxu0 0
        %530 = vmatprep.subr.bf16.mxu0 0
        %531 = vmatpush1.bf16.xpose.msra.mxu0 0
        %532 = vmatprep.subr.bf16.mxu0 0
        %533 = vmatpush1.bf16.xpose.msra.mxu0 0
        %534 = vmatprep.subr.bf16.mxu0 0
        %535 = vmatpush1.bf16.xpose.msra.mxu0 0
        %536 = vmatprep.subr.bf16.mxu0 0
        %537 = vmatpush1.bf16.xpose.msra.mxu0 0
        %538 = vmatprep.subr.bf16.mxu0 0
        %539 = vmatpush1.bf16.xpose.msra.mxu0 0
        %540 = vmatprep.subr.bf16.mxu0 0
        %541 = vmatpush1.bf16.xpose.msra.mxu0 0
        %542 = vmatprep.mubr.bf16.mxu0 0
        %543 = vmatmul.mubr.bf16.gmra.mrb[0].mxu0 %v505
        %v544 = vpop.f32.mrb[0].mxu0
        %v545 = vadd.f32 0.0, %v544
        %v546 = vpop.f32.mrb[0].mxu0
        %v547 = vpop.f32.mrb[0].mxu0
        %v548 = vpop.f32.mrb[0].mxu0
        %549 = vdwg.mxu0
        %v550 = vsel %vm380, %v545, -inf
        %551 = vmax.xlane.f32.xlu0 %v550
        %v552 = vpop.xlane.xlu0 %551
        %v553 = vsub.f32 %v545, %v552
        %v554 = vmul.f32 %v553, 1.442695
        %v555 = vpow.pop %v554
        %v556 = vsel %vm380, %v555, 0.0
        %557 = vadd.xlane.f32.xlu0 %v556
        %v558 = vpop.xlane.xlu0 %557
        %v559 = vrcp.pop %v558
        %v560 = vmul.f32 %v555, %v559
        %v561 = vadd.f32 %v499, %v560
        %562 = vrot.lane.b32.xlu0 %v376, 104
        %v563 = vpop.permute.xlu0 %562
        %564 = vrot.lane.b32.xlu0 %v376, 72
        %v565 = vpop.permute.xlu0 %564
        %v567 = vsel %vm380, %v563, 0
        %v570 = vsel %vm380, %v565, 0
        %572 = vmatprep.subr.bf16.mxu0 0
        %573 = vmatpush1.bf16.xpose.msra.mxu0 %v570
        %574 = vmatprep.subr.bf16.mxu0 0
        %575 = vmatpush1.bf16.xpose.msra.mxu0 0
        %576 = vmatprep.subr.bf16.mxu0 0
        %577 = vmatpush1.bf16.xpose.msra.mxu0 0
        %578 = vmatprep.subr.bf16.mxu0 0
        %579 = vmatpush1.bf16.xpose.msra.mxu0 0
        %580 = vmatprep.subr.bf16.mxu0 0
        %581 = vmatpush1.bf16.xpose.msra.mxu0 0
        %582 = vmatprep.subr.bf16.mxu0 0
        %583 = vmatpush1.bf16.xpose.msra.mxu0 0
        %584 = vmatprep.subr.bf16.mxu0 0
        %585 = vmatpush1.bf16.xpose.msra.mxu0 0
        %586 = vmatprep.subr.bf16.mxu0 0
        %587 = vmatpush1.bf16.xpose.msra.mxu0 0
        %588 = vmatprep.subr.bf16.mxu0 0
        %589 = vmatpush1.bf16.xpose.msra.mxu0 0
        %590 = vmatprep.subr.bf16.mxu0 0
        %591 = vmatpush1.bf16.xpose.msra.mxu0 0
        %592 = vmatprep.subr.bf16.mxu0 0
        %593 = vmatpush1.bf16.xpose.msra.mxu0 0
        %594 = vmatprep.subr.bf16.mxu0 0
        %595 = vmatpush1.bf16.xpose.msra.mxu0 0
        %596 = vmatprep.subr.bf16.mxu0 0
        %597 = vmatpush1.bf16.xpose.msra.mxu0 0
        %598 = vmatprep.subr.bf16.mxu0 0
        %599 = vmatpush1.bf16.xpose.msra.mxu0 0
        %600 = vmatprep.subr.bf16.mxu0 0
        %601 = vmatpush1.bf16.xpose.msra.mxu0 0
        %602 = vmatprep.subr.bf16.mxu0 0
        %603 = vmatpush1.bf16.xpose.msra.mxu0 0
        %604 = vmatprep.mubr.bf16.mxu0 0
        %605 = vmatmul.mubr.bf16.gmra.mrb[0].mxu0 %v567
        %v606 = vpop.f32.mrb[0].mxu0
        %v607 = vadd.f32 0.0, %v606
        %v608 = vpop.f32.mrb[0].mxu0
        %v609 = vpop.f32.mrb[0].mxu0
        %v610 = vpop.f32.mrb[0].mxu0
        %611 = vdwg.mxu0
        %v612 = vsel %vm380, %v607, -inf
        %613 = vmax.xlane.f32.xlu0 %v612
        %v614 = vpop.xlane.xlu0 %613
        %v615 = vsub.f32 %v607, %v614
        %v616 = vmul.f32 %v615, 1.442695
        %v617 = vpow.pop %v616
        %v618 = vsel %vm380, %v617, 0.0
        %619 = vadd.xlane.f32.xlu0 %v618
        %v620 = vpop.xlane.xlu0 %619
        %v621 = vrcp.pop %v620
        %v622 = vmul.f32 %v617, %v621
        %v623 = vadd.f32 %v561, %v622
        %v624 = vmul.f32 %v623, 0.25
        %v625 = vlaneseq
        %v626 = vshrl.u32 %v625, 7
        %v627 = vlaneseq
        %v628 = vand.u32 %v627, 127
        %vm629 = vcmp.eq.s32.totalorder %v626, %v628
        %v630 = vsel %vm629, 1.0, %v624
        %631 = vst.msk [vmem:[%s306] sm:$0xff] %vm380, %v630
        %v632 = vsel %vm380, %v630, 0.0
        %633 = vadd.xlane.f32.xlu0 %v632
        %v634 = vpop.xlane.xlu0 %633
        %v635 = vadd.f32 %v634, 1.0
        %v636 = vrcp.pop %v635
        %v637 = vmul.f32 1.0, %v636
        %v638 = vpack.c.bf16 %v630, %v630
        %v640 = vsel %vm380, %v638, 0
        %vm642 = vcmask 1043456
        %v643 = vsel %vm642, %v308, 0
        %645 = vmatprep.subr.bf16.mxu0 0
        %646 = vmatpush1.bf16.msra.mxu0 %v643
        %647 = vmatprep.subr.bf16.mxu0 0
        %648 = vmatpush1.bf16.msra.mxu0 0
        %649 = vmatprep.subr.bf16.mxu0 0
        %650 = vmatpush1.bf16.msra.mxu0 0
        %651 = vmatprep.subr.bf16.mxu0 0
        %652 = vmatpush1.bf16.msra.mxu0 0
        %653 = vmatprep.subr.bf16.mxu0 0
        %654 = vmatpush1.bf16.msra.mxu0 0
        %655 = vmatprep.subr.bf16.mxu0 0
        %656 = vmatpush1.bf16.msra.mxu0 0
        %657 = vmatprep.subr.bf16.mxu0 0
        %658 = vmatpush1.bf16.msra.mxu0 0
        %659 = vmatprep.subr.bf16.mxu0 0
        %660 = vmatpush1.bf16.msra.mxu0 0
        %661 = vmatprep.subr.bf16.mxu0 0
        %662 = vmatpush1.bf16.msra.mxu0 0
        %663 = vmatprep.subr.bf16.mxu0 0
        %664 = vmatpush1.bf16.msra.mxu0 0
        %665 = vmatprep.subr.bf16.mxu0 0
        %666 = vmatpush1.bf16.msra.mxu0 0
        %667 = vmatprep.subr.bf16.mxu0 0
        %668 = vmatpush1.bf16.msra.mxu0 0
        %669 = vmatprep.subr.bf16.mxu0 0
        %670 = vmatpush1.bf16.msra.mxu0 0
        %671 = vmatprep.subr.bf16.mxu0 0
        %672 = vmatpush1.bf16.msra.mxu0 0
        %673 = vmatprep.subr.bf16.mxu0 0
        %674 = vmatpush1.bf16.msra.mxu0 0
        %675 = vmatprep.subr.bf16.mxu0 0
        %676 = vmatpush1.bf16.msra.mxu0 0
        %677 = vmatprep.mubr.bf16.mxu0 0
        %678 = vmatmul.mubr.bf16.gmra.mrb[0].mxu0 %v640
        %v679 = vpop.f32.mrb[0].mxu0
        %v680 = vadd.f32 0.0, %v679
        %v681 = vpop.f32.mrb[0].mxu0
        %v682 = vpop.f32.mrb[0].mxu0
        %v683 = vpop.f32.mrb[0].mxu0
        %684 = vdwg.mxu0
        %v685 = vpack.c.bf16 %v680, %v680
        %v686 = vld [vmem:[#allocation7] sm:$0xf]
        %v687 = vld [vmem:[#allocation7 + $0x4] sm:$0xf]
        %v688 = vld [vmem:[#allocation7 + $0x8] sm:$0xf]
        %v689 = vld [vmem:[#allocation7 + $0xc] sm:$0xf]
        %v690 = vld [vmem:[%s4] sm:$0x1]
        %v692 = vlaneseq
        %v693 = vshrl.u32 %v692, 7
        %v694 = vsub.s32 0, %v693
        %v695 = vrot.slane %v690, %v694
        %v701 = vunpack.c.l.b16 %v686
        %v702 = vunpack.c.l.b16 %v687
        %v703 = vunpack.c.l.b16 %v688
        %v704 = vunpack.c.l.b16 %v689
        %v705 = vpack.c.b16 %v702, %v701
        %v706 = vpack.c.b16 %v704, %v703
        %v710 = vsel %vm332, %v685, 0
        %712 = vmatprep.subr.bf16.mxu0 0
        %713 = vmatpush1.bf16.msra.mxu0 %v705
        %714 = vmatprep.subr.bf16.mxu0 0
        %715 = vmatpush1.bf16.msra.mxu0 %v706
        %716 = vmatprep.subr.bf16.mxu0 0
        %717 = vmatpush1.bf16.msra.mxu0 0
        %718 = vmatprep.subr.bf16.mxu0 0
        %719 = vmatpush1.bf16.msra.mxu0 0
        %720 = vmatprep.subr.bf16.mxu0 0
        %721 = vmatpush1.bf16.msra.mxu0 0
        %722 = vmatprep.subr.bf16.mxu0 0
        %723 = vmatpush1.bf16.msra.mxu0 0
        %724 = vmatprep.subr.bf16.mxu0 0
        %725 = vmatpush1.bf16.msra.mxu0 0
        %726 = vmatprep.subr.bf16.mxu0 0
        %727 = vmatpush1.bf16.msra.mxu0 0
        %728 = vmatprep.subr.bf16.mxu0 0
        %729 = vmatpush1.bf16.msra.mxu0 0
        %730 = vmatprep.subr.bf16.mxu0 0
        %731 = vmatpush1.bf16.msra.mxu0 0
        %732 = vmatprep.subr.bf16.mxu0 0
        %733 = vmatpush1.bf16.msra.mxu0 0
        %734 = vmatprep.subr.bf16.mxu0 0
        %735 = vmatpush1.bf16.msra.mxu0 0
        %736 = vmatprep.subr.bf16.mxu0 0
        %737 = vmatpush1.bf16.msra.mxu0 0
        %738 = vmatprep.subr.bf16.mxu0 0
        %739 = vmatpush1.bf16.msra.mxu0 0
        %740 = vmatprep.subr.bf16.mxu0 0
        %741 = vmatpush1.bf16.msra.mxu0 0
        %742 = vmatprep.subr.bf16.mxu0 0
        %743 = vmatpush1.bf16.msra.mxu0 0
        %744 = vmatprep.mubr.bf16.mxu0 0
        %745 = vmatmul.mubr.bf16.gmra.mrb[0].mxu0 %v710
        %v746 = vpop.f32.mrb[0].mxu0
        %v747 = vadd.f32 %v695, %v746
        %v748 = vpop.f32.mrb[0].mxu0
        %v749 = vpop.f32.mrb[0].mxu0
        %v750 = vpop.f32.mrb[0].mxu0
        %751 = vdwg.mxu0
        %v752 = vmul.f32 %v747, %v637
        %v753 = vmax.f32 %v752, 0.0
        %v754 = vpack.c.bf16 %v753, %v753
        %v756 = vsel %vm642, %v754, 0
        %758 = vmatprep.subr.bf16.mxu0 0
        %759 = vmatpush1.bf16.msra.mxu0 %v756
        %760 = vmatprep.subr.bf16.mxu0 0
        %761 = vmatpush1.bf16.msra.mxu0 0
        %762 = vmatprep.subr.bf16.mxu0 0
        %763 = vmatpush1.bf16.msra.mxu0 0
        %764 = vmatprep.subr.bf16.mxu0 0
        %765 = vmatpush1.bf16.msra.mxu0 0
        %766 = vmatprep.subr.bf16.mxu0 0
        %767 = vmatpush1.bf16.msra.mxu0 0
        %768 = vmatprep.subr.bf16.mxu0 0
        %769 = vmatpush1.bf16.msra.mxu0 0
        %770 = vmatprep.subr.bf16.mxu0 0
        %771 = vmatpush1.bf16.msra.mxu0 0
        %772 = vmatprep.subr.bf16.mxu0 0
        %773 = vmatpush1.bf16.msra.mxu0 0
        %774 = vmatprep.subr.bf16.mxu0 0
        %775 = vmatpush1.bf16.msra.mxu0 0
        %776 = vmatprep.subr.bf16.mxu0 0
        %777 = vmatpush1.bf16.msra.mxu0 0
        %778 = vmatprep.subr.bf16.mxu0 0
        %779 = vmatpush1.bf16.msra.mxu0 0
        %780 = vmatprep.subr.bf16.mxu0 0
        %781 = vmatpush1.bf16.msra.mxu0 0
        %782 = vmatprep.subr.bf16.mxu0 0
        %783 = vmatpush1.bf16.msra.mxu0 0
        %784 = vmatprep.subr.bf16.mxu0 0
        %785 = vmatpush1.bf16.msra.mxu0 0
        %786 = vmatprep.subr.bf16.mxu0 0
        %787 = vmatpush1.bf16.msra.mxu0 0
        %788 = vmatprep.subr.bf16.mxu0 0
        %789 = vmatpush1.bf16.msra.mxu0 0
        %790 = vmatprep.mubr.bf16.mxu0 0
        %791 = vmatmul.mubr.bf16.gmra.mrb[0].mxu0 %v640
        %v792 = vpop.f32.mrb[0].mxu0
        %v793 = vadd.f32 0.0, %v792
        %v794 = vpop.f32.mrb[0].mxu0
        %v795 = vpop.f32.mrb[0].mxu0
        %v796 = vpop.f32.mrb[0].mxu0
        %797 = vdwg.mxu0
        %v798 = vpack.c.bf16 %v793, %v793
        %s799 = scalar_lea.vmem [#allocation7], 16
        %v800 = vld [vmem:[%s799] sm:$0xf]
        %v801 = vld [vmem:[%s799 + $0x4] sm:$0xf]
        %v802 = vld [vmem:[%s799 + $0x8] sm:$0xf]
        %v803 = vld [vmem:[%s799 + $0xc] sm:$0xf]
        %s804 = scalar_lea.vmem %s4, 1
        %v805 = vld [vmem:[%s804] sm:$0x1]
        %v807 = vlaneseq
        %v808 = vshrl.u32 %v807, 7
        %v809 = vsub.s32 0, %v808
        %v810 = vrot.slane %v805, %v809
        %v816 = vunpack.c.l.b16 %v800
        %v817 = vunpack.c.l.b16 %v801
        %v818 = vunpack.c.l.b16 %v802
        %v819 = vunpack.c.l.b16 %v803
        %v820 = vpack.c.b16 %v817, %v816
        %v821 = vpack.c.b16 %v819, %v818
        %v825 = vsel %vm332, %v798, 0
        %827 = vmatprep.subr.bf16.mxu0 0
        %828 = vmatpush1.bf16.msra.mxu0 %v820
        %829 = vmatprep.subr.bf16.mxu0 0
        %830 = vmatpush1.bf16.msra.mxu0 %v821
        %831 = vmatprep.subr.bf16.mxu0 0
        %832 = vmatpush1.bf16.msra.mxu0 0
        %833 = vmatprep.subr.bf16.mxu0 0
        %834 = vmatpush1.bf16.msra.mxu0 0
        %835 = vmatprep.subr.bf16.mxu0 0
        %836 = vmatpush1.bf16.msra.mxu0 0
        %837 = vmatprep.subr.bf16.mxu0 0
        %838 = vmatpush1.bf16.msra.mxu0 0
        %839 = vmatprep.subr.bf16.mxu0 0
        %840 = vmatpush1.bf16.msra.mxu0 0
        %841 = vmatprep.subr.bf16.mxu0 0
        %842 = vmatpush1.bf16.msra.mxu0 0
        %843 = vmatprep.subr.bf16.mxu0 0
        %844 = vmatpush1.bf16.msra.mxu0 0
        %845 = vmatprep.subr.bf16.mxu0 0
        %846 = vmatpush1.bf16.msra.mxu0 0
        %847 = vmatprep.subr.bf16.mxu0 0
        %848 = vmatpush1.bf16.msra.mxu0 0
        %849 = vmatprep.subr.bf16.mxu0 0
        %850 = vmatpush1.bf16.msra.mxu0 0
        %851 = vmatprep.subr.bf16.mxu0 0
        %852 = vmatpush1.bf16.msra.mxu0 0
        %853 = vmatprep.subr.bf16.mxu0 0
        %854 = vmatpush1.bf16.msra.mxu0 0
        %855 = vmatprep.subr.bf16.mxu0 0
        %856 = vmatpush1.bf16.msra.mxu0 0
        %857 = vmatprep.subr.bf16.mxu0 0
        %858 = vmatpush1.bf16.msra.mxu0 0
        %859 = vmatprep.mubr.bf16.mxu0 0
        %860 = vmatmul.mubr.bf16.gmra.mrb[0].mxu0 %v825
        %v861 = vpop.f32.mrb[0].mxu0
        %v862 = vadd.f32 %v810, %v861
        %v863 = vpop.f32.mrb[0].mxu0
        %v864 = vpop.f32.mrb[0].mxu0
        %v865 = vpop.f32.mrb[0].mxu0
        %866 = vdwg.mxu0
        %v867 = vmul.f32 %v862, %v637
        %v868 = vmax.f32 %v867, 0.0
        %869 = vst.msk [vmem:[%s299] sm:$0xff] %vm332, %v868
        %s870 = sand.u32 %s146, 1
        %s871 = scalar_lea.sflag [#allocation4], %s870
        %s872 = sand.u32 %s146, 1
        %s873 = smul.addr %s872, 8
        %s874 = scalar_lea.vmem [#allocation8], %s873
        %s875 = sand.u32 %s172, 1
        %s876 = scalar_lea.sflag [#allocation10], %s875
        %s877 = sand.u32 %s172, 1
        %s878 = smul.addr %s877, 8
        %s879 = scalar_lea.vmem [#allocation9], %s878
        // Predicated region
        $region53: #{tpu_custom_call.1} parent=39 // pred_check
          %p880 = pneg %p156
        $region54: #{tpu_custom_call.1} parent=39 // pred_check_branch
          %882 = sbr.rel (%p880) target = $region56
        $region55: #{tpu_custom_call.1} parent=39 // pred_region
          %s884 = ssub.s32 128, 128
          %885 = vsyncadd %s871, %s884
          %s886 = smul.addr %s28, 128
          %s887 = scalar_lea.hbm %s5, %s886
          %s889 = sshll.u32 %s874, 4
          %s890 = int_to_ptr.vmem [resolvable:$true] %s889
          %892 = dma.vmem_to_hbm [thread:$0]  %s890, 128, %s887, %s871
        $region56: #{tpu_custom_call.1} parent=39 // pred_fallthru
          _
        // Predicated region
        $region57: #{tpu_custom_call.1} parent=39 // pred_check
          %p893 = pneg %p182
        $region58: #{tpu_custom_call.1} parent=39 // pred_check_branch
          %895 = sbr.rel (%p893) target = $region60
        $region59: #{tpu_custom_call.1} parent=39 // pred_region
          %s897 = ssub.s32 128, 128
          %898 = vsyncadd %s876, %s897
          %s899 = smul.addr %s28, 128
          %s900 = scalar_lea.hbm %s6, %s899
          %s902 = sshll.u32 %s879, 4
          %s903 = int_to_ptr.vmem [resolvable:$true] %s902
          %905 = dma.vmem_to_hbm [thread:$0]  %s903, 128, %s900, %s876
        $region60: #{tpu_custom_call.1} parent=39 // pred_fallthru
          _
      $region40: #{tpu_custom_call.1} parent=5 // pred_fallthru
        _
      %p906 = scmp.le.s32.totalorder 2, %s23
      // Predicated region
      $region61: #{tpu_custom_call.1} parent=5 // pred_check
        %p907 = pneg %p906
      $region62: #{tpu_custom_call.1} parent=5 // pred_check_branch
        %909 = sbr.rel (%p907) target = $region64
      $region63: #{tpu_custom_call.1} parent=5 // pred_region
        %s910 = ssub.s32 %s23, 2
        // Predicated region
        $region65: #{tpu_custom_call.1} parent=63 // pred_check
          %p911 = pneg %p162
        $region66: #{tpu_custom_call.1} parent=63 // pred_check_branch
          %913 = sbr.rel (%p911) target = $region68
        $region67: #{tpu_custom_call.1} parent=63 // pred_region
          %s914 = sand.u32 %s147, 1
          %s915 = scalar_lea.sflag [#allocation4], %s914
          %s916 = sand.u32 %s147, 1
          %s917 = smul.addr %s916, 8
          %s918 = scalar_lea.vmem [#allocation8], %s917
          %919 = dma.done %s915, 128
        $region68: #{tpu_custom_call.1} parent=63 // pred_fallthru
          _
        // Predicated region
        $region69: #{tpu_custom_call.1} parent=63 // pred_check
          %p920 = pneg %p188
        $region70: #{tpu_custom_call.1} parent=63 // pred_check_branch
          %922 = sbr.rel (%p920) target = $region72
        $region71: #{tpu_custom_call.1} parent=63 // pred_region
          %s923 = sand.u32 %s173, 1
          %s924 = scalar_lea.sflag [#allocation10], %s923
          %s925 = sand.u32 %s173, 1
          %s926 = smul.addr %s925, 8
          %s927 = scalar_lea.vmem [#allocation9], %s926
          %928 = dma.done %s924, 128
        $region72: #{tpu_custom_call.1} parent=63 // pred_fallthru
          _
      $region64: #{tpu_custom_call.1} parent=5 // pred_fallthru
        _
    $region6: #{tpu_custom_call.1} parent=1 // loop_footer
      %s27 = sadd.s32 1, %s23
    $region7: #{tpu_custom_call.1} parent=1 // loop_footer_branch
      %22 = sbr.rel target = $region3
    $region8: #{tpu_custom_call.1} parent=1 // loop_exit
      _
    %929 = vsyncpa [#allocation3], 1
    %s930 = scalar_lea.sflag [#allocation3], 1
    %931 = vsyncpa %s930, 1
    %932 = vsyncpa [#allocation6], 1
    %933 = vsyncpa [#allocation4], 1
    %s934 = scalar_lea.sflag [#allocation4], 1
    %935 = vsyncpa %s934, 1
    %936 = vsyncpa [#allocation10], 1
    %s937 = scalar_lea.sflag [#allocation10], 1
    %938 = vsyncpa %s937, 1

// kernel: tpu_custom_call.1
$region0: #{tpu_custom_call.1}
  #allocation0 [shape = 'u32[]', space=smem, size = 0x4, offset = 0x4, fixed_abs, tag = 'smem constant byte address 0x4 - core index']
  #allocation1 [shape = 'u32[144,128]{1,0:T(1,128)}', space=vmem, size = 0x12000, scoped, tag = 'internal scratch']
  %s0 = inlined_call_operand.hbm [shape: bf16[2,8,32], index: 0, kind: input, shape index: {}]
  %s1 = inlined_call_operand.hbm [shape: bf16[32,64], index: 1, kind: input, shape index: {}]
  %s2 = inlined_call_operand.vmem [shape: f32[1,64], index: 2, kind: input, shape index: {}]
  %s3 = inlined_call_operand.hbm [shape: bf16[2,32,32], index: 3, kind: input, shape index: {}]
  %s4 = inlined_call_operand.vmem [shape: f32[2,1,32], index: 4, kind: input, shape index: {}]
  %s5 = inlined_call_operand.hbm [shape: f32[2,8,32], index: 5, kind: output, shape index: {0}]
  %s6 = inlined_call_operand.hbm [shape: f32[2,8,8], index: 6, kind: output, shape index: {1}]
  %7 = xla_tuple %s5, %s6
  %s8 = sld [smem:[#allocation0]]
  $region73: #{tpu_custom_call.1} parent=0
    _
  %s10 = ssub.s32 1, %s8
  %s11 = scalar_select 0, %s10, %s8
  $region1: #{tpu_custom_call.1} parent=0
    #allocation2 [shape = 'u8[4096]{0}', space=vmem, size = 0x1000, scoped, tag = 'input window, operand 0']
    #allocation3 [shape = 's32[2]{0}', space=sflag, size = 0x8, scoped, tag = 'scoped memory for tpu_custom_call.1']
    #allocation4 [shape = 's32[2]{0}', space=sflag, size = 0x8, scoped, tag = 'scoped memory for tpu_custom_call.1']
    #allocation5 [shape = 'u8[8192]{0}', space=vmem, size = 0x2000, scoped, tag = 'input window, operand 1, single buffered']
    #allocation6 [shape = 's32[1]{0}', space=sflag, size = 0x4, scoped, tag = 'scoped memory for tpu_custom_call.1']
    #allocation7 [shape = 'u8[16384]{0}', space=vmem, size = 0x4000, scoped, tag = 'input window, operand 3, single buffered']
    #allocation8 [shape = 'u8[8192]{0}', space=vmem, size = 0x2000, scoped, tag = 'output window, operand 0']
    #allocation9 [shape = 'u8[8192]{0}', space=vmem, size = 0x2000, scoped, tag = 'output window, operand 1']
    #allocation10 [shape = 's32[2]{0}', space=sflag, size = 0x8, scoped, tag = 'scoped memory for tpu_custom_call.1']
    %12 = vsyncpa [#allocation3], 0
    %s13 = scalar_lea.sflag [#allocation3], 1
    %14 = vsyncpa %s13, 0
    %15 = vsyncpa [#allocation6], 0
    %16 = vsyncpa [#allocation4], 0
    %s17 = scalar_lea.sflag [#allocation4], 1
    %18 = vsyncpa %s17, 0
    %19 = vsyncpa [#allocation10], 0
    %s20 = scalar_lea.sflag [#allocation10], 1
    %21 = vsyncpa %s20, 0
    loop: start=0, step=1, limit=4
    $region2: #{tpu_custom_call.1} parent=1 // loop_pre_header
      _
    $region3: #{tpu_custom_call.1} parent=1 // loop_header
      %s23 = sphi 0, %s27
      %p24 = scmp.ge.s32.totalorder %s23, 4
      %s33 = sphi 0, %s35
      %s36 = sphi 0, %s33
      %s37 = sphi 0, %s36
      %s53 = sphi 0, %s37
      %s57 = sphi 0, %s57
      %s59 = sphi 0, %s57
      %s60 = sphi 0, %s59
      %s74 = sphi 0, %s60
      %s78 = sphi 0, %s78
      %s80 = sphi 0, %s78
      %s81 = sphi 0, %s80
      %s95 = sphi 0, %s81
      %s99 = sphi 0, %s99
      %s101 = sphi 0, %s99
      %s102 = sphi 0, %s101
      %s116 = sphi 0, %s102
      %s120 = sphi 0, %s120
      %s122 = sphi 0, %s120
      %s123 = sphi 0, %s122
      %s137 = sphi 0, %s123
      %s143 = sphi 0, %s145
      %s146 = sphi 0, %s143
      %s147 = sphi 0, %s146
      %s163 = sphi 0, %s147
      %s169 = sphi 0, %s171
      %s172 = sphi 0, %s169
      %s173 = sphi 0, %s172
      %s189 = sphi 0, %s173
    $region4: #{tpu_custom_call.1} parent=1 // loop_header_branch
      %26 = sbr.rel (%p24) target = $region8
    $region5: #{tpu_custom_call.1} parent=1 // loop_body
      %s28 = ssub.s32 %s23, 1
      %s29 = ssub.s32 %s23, 2
      %s30 = sadd.s32 %s23, 1
      %s31 = ssub.s32 %s23, %s30
      %p32 = scmp.eq.s32.totalorder %s31, 0
      %s34 = sadd.s32 %s33, 1
      %s35 = scalar_select %p32, %s33, %s34
      %p38 = pneg %p32
      %p39 = scmp.eq.s32.totalorder %s23, 1
      %p40 = por %p38, %p39
      %p41 = scmp.ne.s32.totalorder %s33, %s36
      %p42 = scmp.eq.s32.totalorder %s23, 0
      %p43 = por %p41, %p42
      %p44 = scmp.ne.s32.totalorder %s33, %s36
      %p45 = scmp.eq.s32.totalorder %s28, 1
      %p46 = por %p44, %p45
      %p47 = scmp.ne.s32.totalorder %s36, %s37
      %p48 = scmp.eq.s32.totalorder %s28, 0
      %p49 = por %p47, %p48
      %p50 = scmp.ne.s32.totalorder %s36, %s37
      %p51 = scmp.eq.s32.totalorder %s29, 1
      %p52 = por %p50, %p51
      %p54 = scmp.ne.s32.totalorder %s37, %s53
      %p55 = scmp.eq.s32.totalorder %s29, 0
      %p56 = por %p54, %p55
      %s58 = sadd.s32 %s57, 1
      %p61 = scmp.eq.s32.totalorder %s23, 1
      %p62 = scmp.ne.s32.totalorder %s57, %s59
      %p63 = scmp.eq.s32.totalorder %s23, 0
      %p64 = por %p62, %p63
      %p65 = scmp.ne.s32.totalorder %s57, %s59
      %p66 = scmp.eq.s32.totalorder %s28, 1
      %p67 = por %p65, %p66
      %p68 = scmp.ne.s32.totalorder %s59, %s60
      %p69 = scmp.eq.s32.totalorder %s28, 0
      %p70 = por %p68, %p69
      %p71 = scmp.ne.s32.totalorder %s59, %s60
      %p72 = scmp.eq.s32.totalorder %s29, 1
      %p73 = por %p71, %p72
      %p75 = scmp.ne.s32.totalorder %s60, %s74
      %p76 = scmp.eq.s32.totalorder %s29, 0
      %p77 = por %p75, %p76
      %s79 = sadd.s32 %s78, 1
      %p82 = scmp.eq.s32.totalorder %s23, 1
      %p83 = scmp.ne.s32.totalorder %s78, %s80
      %p84 = scmp.eq.s32.totalorder %s23, 0
      %p85 = por %p83, %p84
      %p86 = scmp.ne.s32.totalorder %s78, %s80
      %p87 = scmp.eq.s32.totalorder %s28, 1
      %p88 = por %p86, %p87
      %p89 = scmp.ne.s32.totalorder %s80, %s81
      %p90 = scmp.eq.s32.totalorder %s28, 0
      %p91 = por %p89, %p90
      %p92 = scmp.ne.s32.totalorder %s80, %s81
      %p93 = scmp.eq.s32.totalorder %s29, 1
      %p94 = por %p92, %p93
      %p96 = scmp.ne.s32.totalorder %s81, %s95
      %p97 = scmp.eq.s32.totalorder %s29, 0
      %p98 = por %p96, %p97
      %s100 = sadd.s32 %s99, 1
      %p103 = scmp.eq.s32.totalorder %s23, 1
      %p104 = scmp.ne.s32.totalorder %s99, %s101
      %p105 = scmp.eq.s32.totalorder %s23, 0
      %p106 = por %p104, %p105
      %p107 = scmp.ne.s32.totalorder %s99, %s101
      %p108 = scmp.eq.s32.totalorder %s28, 1
      %p109 = por %p107, %p108
      %p110 = scmp.ne.s32.totalorder %s101, %s102
      %p111 = scmp.eq.s32.totalorder %s28, 0
      %p112 = por %p110, %p111
      %p113 = scmp.ne.s32.totalorder %s101, %s102
      %p114 = scmp.eq.s32.totalorder %s29, 1
      %p115 = por %p113, %p114
      %p117 = scmp.ne.s32.totalorder %s102, %s116
      %p118 = scmp.eq.s32.totalorder %s29, 0
      %p119 = por %p117, %p118
      %s121 = sadd.s32 %s120, 1
      %p124 = scmp.eq.s32.totalorder %s23, 1
      %p125 = scmp.ne.s32.totalorder %s120, %s122
      %p126 = scmp.eq.s32.totalorder %s23, 0
      %p127 = por %p125, %p126
      %p128 = scmp.ne.s32.totalorder %s120, %s122
      %p129 = scmp.eq.s32.totalorder %s28, 1
      %p130 = por %p128, %p129
      %p131 = scmp.ne.s32.totalorder %s122, %s123
      %p132 = scmp.eq.s32.totalorder %s28, 0
      %p133 = por %p131, %p132
      %p134 = scmp.ne.s32.totalorder %s122, %s123
      %p135 = scmp.eq.s32.totalorder %s29, 1
      %p136 = por %p134, %p135
      %p138 = scmp.ne.s32.totalorder %s123, %s137
      %p139 = scmp.eq.s32.totalorder %s29, 0
      %p140 = por %p138, %p139
      %s141 = ssub.s32 %s23, %s30
      %p142 = scmp.eq.s32.totalorder %s141, 0
      %s144 = sadd.s32 %s143, 1
      %s145 = scalar_select %p142, %s143, %s144
      %p148 = pneg %p142
      %p149 = scmp.eq.s32.totalorder %s23, 1
      %p150 = por %p148, %p149
      %p151 = scmp.ne.s32.totalorder %s143, %s146
      %p152 = scmp.eq.s32.totalorder %s23, 0
      %p153 = por %p151, %p152
      %p154 = scmp.ne.s32.totalorder %s143, %s146
      %p155 = scmp.eq.s32.totalorder %s28, 1
      %p156 = por %p154, %p155
      %p157 = scmp.ne.s32.totalorder %s146, %s147
      %p158 = scmp.eq.s32.totalorder %s28, 0
      %p159 = por %p157, %p158
      %p160 = scmp.ne.s32.totalorder %s146, %s147
      %p161 = scmp.eq.s32.totalorder %s29, 1
      %p162 = por %p160, %p161
      %p164 = scmp.ne.s32.totalorder %s147, %s163
      %p165 = scmp.eq.s32.totalorder %s29, 0
      %p166 = por %p164, %p165
      %s167 = ssub.s32 %s23, %s30
      %p168 = scmp.eq.s32.totalorder %s167, 0
      %s170 = sadd.s32 %s169, 1
      %s171 = scalar_select %p168, %s169, %s170
      %p174 = pneg %p168
      %p175 = scmp.eq.s32.totalorder %s23, 1
      %p176 = por %p174, %p175
      %p177 = scmp.ne.s32.totalorder %s169, %s172
      %p178 = scmp.eq.s32.totalorder %s23, 0
      %p179 = por %p177, %p178
      %p180 = scmp.ne.s32.totalorder %s169, %s172
      %p181 = scmp.eq.s32.totalorder %s28, 1
      %p182 = por %p180, %p181
      %p183 = scmp.ne.s32.totalorder %s172, %s173
      %p184 = scmp.eq.s32.totalorder %s28, 0
      %p185 = por %p183, %p184
      %p186 = scmp.ne.s32.totalorder %s172, %s173
      %p187 = scmp.eq.s32.totalorder %s29, 1
      %p188 = por %p186, %p187
      %p190 = scmp.ne.s32.totalorder %s173, %s189
      %p191 = scmp.eq.s32.totalorder %s29, 0
      %p192 = por %p190, %p191
      %p193 = scmp.le.s32.totalorder 1, %s23
      %p194 = scmp.lt.s32.totalorder %s23, 3
      %p195 = pnand %p193, %p194
      %p196 = pneg %p195
      // Predicated region
      $region9: #{tpu_custom_call.1} parent=5 // pred_check
        _
      $region10: #{tpu_custom_call.1} parent=5 // pred_check_branch
        %198 = sbr.rel (%p195) target = $region12
      $region11: #{tpu_custom_call.1} parent=5 // pred_region
        %s199 = ssub.s32 %s23, 1
        // Predicated region
        $region13: #{tpu_custom_call.1} parent=11 // pred_check
          %p200 = pneg %p70
        $region14: #{tpu_custom_call.1} parent=11 // pred_check_branch
          %202 = sbr.rel (%p200) target = $region16
        $region15: #{tpu_custom_call.1} parent=11 // pred_region
          %s204 = ssub.s32 256, 256
          %205 = vsyncadd [#allocation6], %s204
          %s206 = sshll.u32 [#allocation5], 4
          %s207 = int_to_ptr.vmem [resolvable:$true] %s206
          %212 = dma.hbm_to_vmem [thread:$0]  %s1, 256, %s207, [#allocation6], 64, 64, 4
        $region16: #{tpu_custom_call.1} parent=11 // pred_fallthru
          _
        // Predicated region
        $region17: #{tpu_custom_call.1} parent=11 // pred_check
          %p213 = pneg %p91
        $region18: #{tpu_custom_call.1} parent=11 // pred_check_branch
          %215 = sbr.rel (%p213) target = $region20
        $region19: #{tpu_custom_call.1} parent=11 // pred_region
          _
        $region20: #{tpu_custom_call.1} parent=11 // pred_fallthru
          _
        // Predicated region
        $region21: #{tpu_custom_call.1} parent=11 // pred_check
          %p216 = pneg %p112
        $region22: #{tpu_custom_call.1} parent=11 // pred_check_branch
          %218 = sbr.rel (%p216) target = $region24
        $region23: #{tpu_custom_call.1} parent=11 // pred_region
          %s220 = ssub.s32 512, 512
          %221 = vsyncadd [#allocation6], %s220
          %s222 = sshll.u32 [#allocation7], 4
          %s223 = int_to_ptr.vmem [resolvable:$true] %s222
          %228 = dma.hbm_to_vmem [thread:$0]  %s3, 512, %s223, [#allocation6], 64, 64, 4
        $region24: #{tpu_custom_call.1} parent=11 // pred_fallthru
          _
        // Predicated region
        $region25: #{tpu_custom_call.1} parent=11 // pred_check
          %p229 = pneg %p133
        $region26: #{tpu_custom_call.1} parent=11 // pred_check_branch
          %231 = sbr.rel (%p229) target = $region28
        $region27: #{tpu_custom_call.1} parent=11 // pred_region
          _
        $region28: #{tpu_custom_call.1} parent=11 // pred_fallthru
          _
      $region12: #{tpu_custom_call.1} parent=5 // pred_fallthru
        _
      %p232 = scmp.lt.s32.totalorder %s23, 2
      // Predicated region
      $region29: #{tpu_custom_call.1} parent=5 // pred_check
        %p233 = pneg %p232
      $region30: #{tpu_custom_call.1} parent=5 // pred_check_branch
        %235 = sbr.rel (%p233) target = $region32
      $region31: #{tpu_custom_call.1} parent=5 // pred_region
        // Predicated region
        $region33: #{tpu_custom_call.1} parent=31 // pred_check
          %p236 = pneg %p43
        $region34: #{tpu_custom_call.1} parent=31 // pred_check_branch
          %238 = sbr.rel (%p236) target = $region36
        $region35: #{tpu_custom_call.1} parent=31 // pred_region
          %s239 = sand.u32 %s33, 1
          %s240 = scalar_lea.sflag [#allocation3], %s239
          %s241 = sand.u32 %s33, 1
          %s242 = smul.addr %s241, 4
          %s243 = scalar_lea.vmem [#allocation2], %s242
          %s245 = ssub.s32 64, 64
          %246 = vsyncadd %s240, %s245
          %s247 = smul.addr %s23, 64
          %s248 = scalar_lea.hbm %s0, %s247
          %s250 = sshll.u32 %s243, 4
          %s251 = int_to_ptr.vmem [resolvable:$true] %s250
          %253 = dma.hbm_to_vmem [thread:$0]  %s248, 64, %s251, %s240
        $region36: #{tpu_custom_call.1} parent=31 // pred_fallthru
          _
      $region32: #{tpu_custom_call.1} parent=5 // pred_fallthru
        _
      %p254 = scmp.le.s32.totalorder 1, %s23
      %p255 = scmp.lt.s32.totalorder %s23, 3
      %p256 = pnand %p254, %p255
      %p257 = pneg %p256
      // Predicated region
      $region37: #{tpu_custom_call.1} parent=5 // pred_check
        _
      $region38: #{tpu_custom_call.1} parent=5 // pred_check_branch
        %259 = sbr.rel (%p256) target = $region40
      $region39: #{tpu_custom_call.1} parent=5 // pred_region
        %s260 = ssub.s32 %s23, 1
        %s261 = sand.u32 %s36, 1
        %s262 = scalar_lea.sflag [#allocation3], %s261
        %s263 = sand.u32 %s36, 1
        %s264 = smul.addr %s263, 4
        %s265 = scalar_lea.vmem [#allocation2], %s264
        // Predicated region
        $region41: #{tpu_custom_call.1} parent=39 // pred_check
          %p266 = pneg %p49
        $region42: #{tpu_custom_call.1} parent=39 // pred_check_branch
          %268 = sbr.rel (%p266) target = $region44
        $region43: #{tpu_custom_call.1} parent=39 // pred_region
          %269 = dma.done %s262, 64
        $region44: #{tpu_custom_call.1} parent=39 // pred_fallthru
          _
        // Predicated region
        $region45: #{tpu_custom_call.1} parent=39 // pred_check
          %p270 = pneg %p70
        $region46: #{tpu_custom_call.1} parent=39 // pred_check_branch
          %272 = sbr.rel (%p270) target = $region48
        $region47: #{tpu_custom_call.1} parent=39 // pred_region
          %273 = dma.done [#allocation6], 256
        $region48: #{tpu_custom_call.1} parent=39 // pred_fallthru
          _
        // Predicated region
        $region49: #{tpu_custom_call.1} parent=39 // pred_check
          %p274 = pneg %p112
        $region50: #{tpu_custom_call.1} parent=39 // pred_check_branch
          %276 = sbr.rel (%p274) target = $region52
        $region51: #{tpu_custom_call.1} parent=39 // pred_region
          %277 = dma.done [#allocation6], 512
        $region52: #{tpu_custom_call.1} parent=39 // pred_fallthru
          _
        %s278 = sand.u32 %s36, 1
        %s279 = scalar_lea.sflag [#allocation3], %s278
        %s280 = sand.u32 %s36, 1
        %s281 = smul.addr %s280, 4
        %s282 = scalar_lea.vmem [#allocation2], %s281
        %p283 = pneg %p49
        %p284 = pneg %p46
        %p285 = pneg %p70
        %p286 = pneg %p67
        %p287 = pneg %p91
        %p288 = pneg %p88
        %p289 = pneg %p112
        %p290 = pneg %p109
        %p291 = pneg %p133
        %p292 = pneg %p130
        %p293 = pneg %p159
        %p294 = pneg %p156
        %s295 = sand.u32 %s146, 1
        %s296 = scalar_lea.sflag [#allocation4], %s295
        %s297 = sand.u32 %s146, 1
        %s298 = smul.addr %s297, 8
        %s299 = scalar_lea.vmem [#allocation8], %s298
        %p300 = pneg %p185
        %p301 = pneg %p182
        %s302 = sand.u32 %s172, 1
        %s303 = scalar_lea.sflag [#allocation10], %s302
        %s304 = sand.u32 %s172, 1
        %s305 = smul.addr %s304, 8
        %s306 = scalar_lea.vmem [#allocation9], %s305
        %v308 = vld [vmem:[%s265] sm:$0xf]
        %v309 = vld [vmem:[#allocation5] sm:$0xf]
        %v310 = vld [vmem:[#allocation5 + $0x4] sm:$0xf]
        %v311 = vld [vmem:[#allocation5 + $0x8] sm:$0xf]
        %v312 = vld [vmem:[#allocation5 + $0xc] sm:$0xf]
        %v313 = vld [vmem:[%s2] sm:$0x1]
        %v315 = vlaneseq
        %v316 = vshrl.u32 %v315, 7
        %v317 = vsub.s32 0, %v316
        %v318 = vrot.slane %v313, %v317
        %v324 = vunpack.c.l.b16 %v309
        %v325 = vunpack.c.l.b16 %v310
        %v326 = vunpack.c.l.b16 %v311
        %v327 = vunpack.c.l.b16 %v312
        %v328 = vpack.c.b16 %v325, %v324
        %v329 = vpack.c.b16 %v327, %v326
        %vm332 = vcmask 261120
        %v334 = vsel %vm332, %v308, 0
        %336 = vmatprep.subr.bf16.mxu0 0
        %337 = vmatpush1.bf16.msra.mxu0 %v328
        %338 = vmatprep.subr.bf16.mxu0 0
        %339 = vmatpush1.bf16.msra.mxu0 %v329
        %340 = vmatprep.subr.bf16.mxu0 0
        %341 = vmatpush1.bf16.msra.mxu0 0
        %342 = vmatprep.subr.bf16.mxu0 0
        %343 = vmatpush1.bf16.msra.mxu0 0
        %344 = vmatprep.subr.bf16.mxu0 0
        %345 = vmatpush1.bf16.msra.mxu0 0
        %346 = vmatprep.subr.bf16.mxu0 0
        %347 = vmatpush1.bf16.msra.mxu0 0
        %348 = vmatprep.subr.bf16.mxu0 0
        %349 = vmatpush1.bf16.msra.mxu0 0
        %350 = vmatprep.subr.bf16.mxu0 0
        %351 = vmatpush1.bf16.msra.mxu0 0
        %352 = vmatprep.subr.bf16.mxu0 0
        %353 = vmatpush1.bf16.msra.mxu0 0
        %354 = vmatprep.subr.bf16.mxu0 0
        %355 = vmatpush1.bf16.msra.mxu0 0
        %356 = vmatprep.subr.bf16.mxu0 0
        %357 = vmatpush1.bf16.msra.mxu0 0
        %358 = vmatprep.subr.bf16.mxu0 0
        %359 = vmatpush1.bf16.msra.mxu0 0
        %360 = vmatprep.subr.bf16.mxu0 0
        %361 = vmatpush1.bf16.msra.mxu0 0
        %362 = vmatprep.subr.bf16.mxu0 0
        %363 = vmatpush1.bf16.msra.mxu0 0
        %364 = vmatprep.subr.bf16.mxu0 0
        %365 = vmatpush1.bf16.msra.mxu0 0
        %366 = vmatprep.subr.bf16.mxu0 0
        %367 = vmatpush1.bf16.msra.mxu0 0
        %368 = vmatprep.mubr.bf16.mxu0 0
        %369 = vmatmul.mubr.bf16.gmra.mrb[0].mxu0 %v334
        %v370 = vpop.f32.mrb[0].mxu0
        %v371 = vadd.f32 %v318, %v370
        %v372 = vpop.f32.mrb[0].mxu0
        %v373 = vpop.f32.mrb[0].mxu0
        %v374 = vpop.f32.mrb[0].mxu0
        %375 = vdwg.mxu0
        %v376 = vpack.c.bf16 %v371, %v371
        %378 = vrot.lane.b32.xlu0 %v376, 96
        %v379 = vpop.permute.xlu0 %378
        %vm380 = vcmask 64512
        %v382 = vsel %vm380, %v376, 0
        %v385 = vsel %vm380, %v379, 0
        %387 = vmatprep.subr.bf16.mxu0 0
        %388 = vmatpush1.bf16.xpose.msra.mxu0 %v385
        %389 = vmatprep.subr.bf16.mxu0 0
        %390 = vmatpush1.bf16.xpose.msra.mxu0 0
        %391 = vmatprep.subr.bf16.mxu0 0
        %392 = vmatpush1.bf16.xpose.msra.mxu0 0
        %393 = vmatprep.subr.bf16.mxu0 0
        %394 = vmatpush1.bf16.xpose.msra.mxu0 0
        %395 = vmatprep.subr.bf16.mxu0 0
        %396 = vmatpush1.bf16.xpose.msra.mxu0 0
        %397 = vmatprep.subr.bf16.mxu0 0
        %398 = vmatpush1.bf16.xpose.msra.mxu0 0
        %399 = vmatprep.subr.bf16.mxu0 0
        %400 = vmatpush1.bf16.xpose.msra.mxu0 0
        %401 = vmatprep.subr.bf16.mxu0 0
        %402 = vmatpush1.bf16.xpose.msra.mxu0 0
        %403 = vmatprep.subr.bf16.mxu0 0
        %404 = vmatpush1.bf16.xpose.msra.mxu0 0
        %405 = vmatprep.subr.bf16.mxu0 0
        %406 = vmatpush1.bf16.xpose.msra.mxu0 0
        %407 = vmatprep.subr.bf16.mxu0 0
        %408 = vmatpush1.bf16.xpose.msra.mxu0 0
        %409 = vmatprep.subr.bf16.mxu0 0
        %410 = vmatpush1.bf16.xpose.msra.mxu0 0
        %411 = vmatprep.subr.bf16.mxu0 0
        %412 = vmatpush1.bf16.xpose.msra.mxu0 0
        %413 = vmatprep.subr.bf16.mxu0 0
        %414 = vmatpush1.bf16.xpose.msra.mxu0 0
        %415 = vmatprep.subr.bf16.mxu0 0
        %416 = vmatpush1.bf16.xpose.msra.mxu0 0
        %417 = vmatprep.subr.bf16.mxu0 0
        %418 = vmatpush1.bf16.xpose.msra.mxu0 0
        %419 = vmatprep.mubr.bf16.mxu0 0
        %420 = vmatmul.mubr.bf16.gmra.mrb[0].mxu0 %v382
        %v421 = vpop.f32.mrb[0].mxu0
        %v422 = vadd.f32 0.0, %v421
        %v423 = vpop.f32.mrb[0].mxu0
        %v424 = vpop.f32.mrb[0].mxu0
        %v425 = vpop.f32.mrb[0].mxu0
        %426 = vdwg.mxu0
        %v427 = vsel %vm380, %v422, -inf
        %428 = vmax.xlane.f32.xlu0 %v427
        %v429 = vpop.xlane.xlu0 %428
        %v430 = vsub.f32 %v422, %v429
        %v431 = vmul.f32 %v430, 1.442695
        %v432 = vpow.pop %v431
        %v433 = vsel %vm380, %v432, 0.0
        %434 = vadd.xlane.f32.xlu0 %v433
        %v435 = vpop.xlane.xlu0 %434
        %v436 = vrcp.pop %v435
        %v437 = vmul.f32 %v432, %v436
        %438 = vrot.lane.b32.xlu0 %v376, 120
        %v439 = vpop.permute.xlu0 %438
        %440 = vrot.lane.b32.xlu0 %v376, 88
        %v441 = vpop.permute.xlu0 %440
        %v443 = vsel %vm380, %v439, 0
        %v446 = vsel %vm380, %v441, 0
        %448 = vmatprep.subr.bf16.mxu0 0
        %449 = vmatpush1.bf16.xpose.msra.mxu0 %v446
        %450 = vmatprep.subr.bf16.mxu0 0
        %451 = vmatpush1.bf16.xpose.msra.mxu0 0
        %452 = vmatprep.subr.bf16.mxu0 0
        %453 = vmatpush1.bf16.xpose.msra.mxu0 0
        %454 = vmatprep.subr.bf16.mxu0 0
        %455 = vmatpush1.bf16.xpose.msra.mxu0 0
        %456 = vmatprep.subr.bf16.mxu0 0
        %457 = vmatpush1.bf16.xpose.msra.mxu0 0
        %458 = vmatprep.subr.bf16.mxu0 0
        %459 = vmatpush1.bf16.xpose.msra.mxu0 0
        %460 = vmatprep.subr.bf16.mxu0 0
        %461 = vmatpush1.bf16.xpose.msra.mxu0 0
        %462 = vmatprep.subr.bf16.mxu0 0
        %463 = vmatpush1.bf16.xpose.msra.mxu0 0
        %464 = vmatprep.subr.bf16.mxu0 0
        %465 = vmatpush1.bf16.xpose.msra.mxu0 0
        %466 = vmatprep.subr.bf16.mxu0 0
        %467 = vmatpush1.bf16.xpose.msra.mxu0 0
        %468 = vmatprep.subr.bf16.mxu0 0
        %469 = vmatpush1.bf16.xpose.msra.mxu0 0
        %470 = vmatprep.subr.bf16.mxu0 0
        %471 = vmatpush1.bf16.xpose.msra.mxu0 0
        %472 = vmatprep.subr.bf16.mxu0 0
        %473 = vmatpush1.bf16.xpose.msra.mxu0 0
        %474 = vmatprep.subr.bf16.mxu0 0
        %475 = vmatpush1.bf16.xpose.msra.mxu0 0
        %476 = vmatprep.subr.bf16.mxu0 0
        %477 = vmatpush1.bf16.xpose.msra.mxu0 0
        %478 = vmatprep.subr.bf16.mxu0 0
        %479 = vmatpush1.bf16.xpose.msra.mxu0 0
        %480 = vmatprep.mubr.bf16.mxu0 0
        %481 = vmatmul.mubr.bf16.gmra.mrb[0].mxu0 %v443
        %v482 = vpop.f32.mrb[0].mxu0
        %v483 = vadd.f32 0.0, %v482
        %v484 = vpop.f32.mrb[0].mxu0
        %v485 = vpop.f32.mrb[0].mxu0
        %v486 = vpop.f32.mrb[0].mxu0
        %487 = vdwg.mxu0
        %v488 = vsel %vm380, %v483, -inf
        %489 = vmax.xlane.f32.xlu0 %v488
        %v490 = vpop.xlane.xlu0 %489
        %v491 = vsub.f32 %v483, %v490
        %v492 = vmul.f32 %v491, 1.442695
        %v493 = vpow.pop %v492
        %v494 = vsel %vm380, %v493, 0.0
        %495 = vadd.xlane.f32.xlu0 %v494
        %v496 = vpop.xlane.xlu0 %495
        %v497 = vrcp.pop %v496
        %v498 = vmul.f32 %v493, %v497
        %v499 = vadd.f32 %v437, %v498
        %500 = vrot.lane.b32.xlu0 %v376, 112
        %v501 = vpop.permute.xlu0 %500
        %502 = vrot.lane.b32.xlu0 %v376, 80
        %v503 = vpop.permute.xlu0 %502
        %v505 = vsel %vm380, %v501, 0
        %v508 = vsel %vm380, %v503, 0
        %510 = vmatprep.subr.bf16.mxu0 0
        %511 = vmatpush1.bf16.xpose.msra.mxu0 %v508
        %512 = vmatprep.subr.bf16.mxu0 0
        %513 = vmatpush1.bf16.xpose.msra.mxu0 0
        %514 = vmatprep.subr.bf16.mxu0 0
        %515 = vmatpush1.bf16.xpose.msra.mxu0 0
        %516 = vmatprep.subr.bf16.mxu0 0
        %517 = vmatpush1.bf16.xpose.msra.mxu0 0
        %518 = vmatprep.subr.bf16.mxu0 0
        %519 = vmatpush1.bf16.xpose.msra.mxu0 0
        %520 = vmatprep.subr.bf16.mxu0 0
        %521 = vmatpush1.bf16.xpose.msra.mxu0 0
        %522 = vmatprep.subr.bf16.mxu0 0
        %523 = vmatpush1.bf16.xpose.msra.mxu0 0
        %524 = vmatprep.subr.bf16.mxu0 0
        %525 = vmatpush1.bf16.xpose.msra.mxu0 0
        %526 = vmatprep.subr.bf16.mxu0 0
        %527 = vmatpush1.bf16.xpose.msra.mxu0 0
        %528 = vmatprep.subr.bf16.mxu0 0
        %529 = vmatpush1.bf16.xpose.msra.mxu0 0
        %530 = vmatprep.subr.bf16.mxu0 0
        %531 = vmatpush1.bf16.xpose.msra.mxu0 0
        %532 = vmatprep.subr.bf16.mxu0 0
        %533 = vmatpush1.bf16.xpose.msra.mxu0 0
        %534 = vmatprep.subr.bf16.mxu0 0
        %535 = vmatpush1.bf16.xpose.msra.mxu0 0
        %536 = vmatprep.subr.bf16.mxu0 0
        %537 = vmatpush1.bf16.xpose.msra.mxu0 0
        %538 = vmatprep.subr.bf16.mxu0 0
        %539 = vmatpush1.bf16.xpose.msra.mxu0 0
        %540 = vmatprep.subr.bf16.mxu0 0
        %541 = vmatpush1.bf16.xpose.msra.mxu0 0
        %542 = vmatprep.mubr.bf16.mxu0 0
        %543 = vmatmul.mubr.bf16.gmra.mrb[0].mxu0 %v505
        %v544 = vpop.f32.mrb[0].mxu0
        %v545 = vadd.f32 0.0, %v544
        %v546 = vpop.f32.mrb[0].mxu0
        %v547 = vpop.f32.mrb[0].mxu0
        %v548 = vpop.f32.mrb[0].mxu0
        %549 = vdwg.mxu0
        %v550 = vsel %vm380, %v545, -inf
        %551 = vmax.xlane.f32.xlu0 %v550
        %v552 = vpop.xlane.xlu0 %551
        %v553 = vsub.f32 %v545, %v552
        %v554 = vmul.f32 %v553, 1.442695
        %v555 = vpow.pop %v554
        %v556 = vsel %vm380, %v555, 0.0
        %557 = vadd.xlane.f32.xlu0 %v556
        %v558 = vpop.xlane.xlu0 %557
        %v559 = vrcp.pop %v558
        %v560 = vmul.f32 %v555, %v559
        %v561 = vadd.f32 %v499, %v560
        %562 = vrot.lane.b32.xlu0 %v376, 104
        %v563 = vpop.permute.xlu0 %562
        %564 = vrot.lane.b32.xlu0 %v376, 72
        %v565 = vpop.permute.xlu0 %564
        %v567 = vsel %vm380, %v563, 0
        %v570 = vsel %vm380, %v565, 0
        %572 = vmatprep.subr.bf16.mxu0 0
        %573 = vmatpush1.bf16.xpose.msra.mxu0 %v570
        %574 = vmatprep.subr.bf16.mxu0 0
        %575 = vmatpush1.bf16.xpose.msra.mxu0 0
        %576 = vmatprep.subr.bf16.mxu0 0
        %577 = vmatpush1.bf16.xpose.msra.mxu0 0
        %578 = vmatprep.subr.bf16.mxu0 0
        %579 = vmatpush1.bf16.xpose.msra.mxu0 0
        %580 = vmatprep.subr.bf16.mxu0 0
        %581 = vmatpush1.bf16.xpose.msra.mxu0 0
        %582 = vmatprep.subr.bf16.mxu0 0
        %583 = vmatpush1.bf16.xpose.msra.mxu0 0
        %584 = vmatprep.subr.bf16.mxu0 0
        %585 = vmatpush1.bf16.xpose.msra.mxu0 0
        %586 = vmatprep.subr.bf16.mxu0 0
        %587 = vmatpush1.bf16.xpose.msra.mxu0 0
        %588 = vmatprep.subr.bf16.mxu0 0
        %589 = vmatpush1.bf16.xpose.msra.mxu0 0
        %590 = vmatprep.subr.bf16.mxu0 0
        %591 = vmatpush1.bf16.xpose.msra.mxu0 0
        %592 = vmatprep.subr.bf16.mxu0 0
        %593 = vmatpush1.bf16.xpose.msra.mxu0 0
        %594 = vmatprep.subr.bf16.mxu0 0
        %595 = vmatpush1.bf16.xpose.msra.mxu0 0
        %596 = vmatprep.subr.bf16.mxu0 0
        %597 = vmatpush1.bf16.xpose.msra.mxu0 0
        %598 = vmatprep.subr.bf16.mxu0 0
        %599 = vmatpush1.bf16.xpose.msra.mxu0 0
        %600 = vmatprep.subr.bf16.mxu0 0
        %601 = vmatpush1.bf16.xpose.msra.mxu0 0
        %602 = vmatprep.subr.bf16.mxu0 0
        %603 = vmatpush1.bf16.xpose.msra.mxu0 0
        %604 = vmatprep.mubr.bf16.mxu0 0
        %605 = vmatmul.mubr.bf16.gmra.mrb[0].mxu0 %v567
        %v606 = vpop.f32.mrb[0].mxu0
        %v607 = vadd.f32 0.0, %v606
        %v608 = vpop.f32.mrb[0].mxu0
        %v609 = vpop.f32.mrb[0].mxu0
        %v610 = vpop.f32.mrb[0].mxu0
        %611 = vdwg.mxu0
        %v612 = vsel %vm380, %v607, -inf
        %613 = vmax.xlane.f32.xlu0 %v612
        %v614 = vpop.xlane.xlu0 %613
        %v615 = vsub.f32 %v607, %v614
        %v616 = vmul.f32 %v615, 1.442695
        %v617 = vpow.pop %v616
        %v618 = vsel %vm380, %v617, 0.0
        %619 = vadd.xlane.f32.xlu0 %v618
        %v620 = vpop.xlane.xlu0 %619
        %v621 = vrcp.pop %v620
        %v622 = vmul.f32 %v617, %v621
        %v623 = vadd.f32 %v561, %v622
        %v624 = vmul.f32 %v623, 0.25
        %v625 = vlaneseq
        %v626 = vshrl.u32 %v625, 7
        %v627 = vlaneseq
        %v628 = vand.u32 %v627, 127
        %vm629 = vcmp.eq.s32.totalorder %v626, %v628
        %v630 = vsel %vm629, 1.0, %v624
        %631 = vst.msk [vmem:[%s306] sm:$0xff] %vm380, %v630
        %v632 = vsel %vm380, %v630, 0.0
        %633 = vadd.xlane.f32.xlu0 %v632
        %v634 = vpop.xlane.xlu0 %633
        %v635 = vadd.f32 %v634, 1.0
        %v636 = vrcp.pop %v635
        %v637 = vmul.f32 1.0, %v636
        %v638 = vpack.c.bf16 %v630, %v630
        %v640 = vsel %vm380, %v638, 0
        %vm642 = vcmask 1043456
        %v643 = vsel %vm642, %v308, 0
        %645 = vmatprep.subr.bf16.mxu0 0
        %646 = vmatpush1.bf16.msra.mxu0 %v643
        %647 = vmatprep.subr.bf16.mxu0 0
        %648 = vmatpush1.bf16.msra.mxu0 0
        %649 = vmatprep.subr.bf16.mxu0 0
        %650 = vmatpush1.bf16.msra.mxu0 0
        %651 = vmatprep.subr.bf16.mxu0 0
        %652 = vmatpush1.bf16.msra.mxu0 0
        %653 = vmatprep.subr.bf16.mxu0 0
        %654 = vmatpush1.bf16.msra.mxu0 0
        %655 = vmatprep.subr.bf16.mxu0 0
        %656 = vmatpush1.bf16.msra.mxu0 0
        %657 = vmatprep.subr.bf16.mxu0 0
        %658 = vmatpush1.bf16.msra.mxu0 0
        %659 = vmatprep.subr.bf16.mxu0 0
        %660 = vmatpush1.bf16.msra.mxu0 0
        %661 = vmatprep.subr.bf16.mxu0 0
        %662 = vmatpush1.bf16.msra.mxu0 0
        %663 = vmatprep.subr.bf16.mxu0 0
        %664 = vmatpush1.bf16.msra.mxu0 0
        %665 = vmatprep.subr.bf16.mxu0 0
        %666 = vmatpush1.bf16.msra.mxu0 0
        %667 = vmatprep.subr.bf16.mxu0 0
        %668 = vmatpush1.bf16.msra.mxu0 0
        %669 = vmatprep.subr.bf16.mxu0 0
        %670 = vmatpush1.bf16.msra.mxu0 0
        %671 = vmatprep.subr.bf16.mxu0 0
        %672 = vmatpush1.bf16.msra.mxu0 0
        %673 = vmatprep.subr.bf16.mxu0 0
        %674 = vmatpush1.bf16.msra.mxu0 0
        %675 = vmatprep.subr.bf16.mxu0 0
        %676 = vmatpush1.bf16.msra.mxu0 0
        %677 = vmatprep.mubr.bf16.mxu0 0
        %678 = vmatmul.mubr.bf16.gmra.mrb[0].mxu0 %v640
        %v679 = vpop.f32.mrb[0].mxu0
        %v680 = vadd.f32 0.0, %v679
        %v681 = vpop.f32.mrb[0].mxu0
        %v682 = vpop.f32.mrb[0].mxu0
        %v683 = vpop.f32.mrb[0].mxu0
        %684 = vdwg.mxu0
        %v685 = vpack.c.bf16 %v680, %v680
        %v686 = vld [vmem:[#allocation7] sm:$0xf]
        %v687 = vld [vmem:[#allocation7 + $0x4] sm:$0xf]
        %v688 = vld [vmem:[#allocation7 + $0x8] sm:$0xf]
        %v689 = vld [vmem:[#allocation7 + $0xc] sm:$0xf]
        %v690 = vld [vmem:[%s4] sm:$0x1]
        %v692 = vlaneseq
        %v693 = vshrl.u32 %v692, 7
        %v694 = vsub.s32 0, %v693
        %v695 = vrot.slane %v690, %v694
        %v701 = vunpack.c.l.b16 %v686
        %v702 = vunpack.c.l.b16 %v687
        %v703 = vunpack.c.l.b16 %v688
        %v704 = vunpack.c.l.b16 %v689
        %v705 = vpack.c.b16 %v702, %v701
        %v706 = vpack.c.b16 %v704, %v703
        %v710 = vsel %vm332, %v685, 0
        %712 = vmatprep.subr.bf16.mxu0 0
        %713 = vmatpush1.bf16.msra.mxu0 %v705
        %714 = vmatprep.subr.bf16.mxu0 0
        %715 = vmatpush1.bf16.msra.mxu0 %v706
        %716 = vmatprep.subr.bf16.mxu0 0
        %717 = vmatpush1.bf16.msra.mxu0 0
        %718 = vmatprep.subr.bf16.mxu0 0
        %719 = vmatpush1.bf16.msra.mxu0 0
        %720 = vmatprep.subr.bf16.mxu0 0
        %721 = vmatpush1.bf16.msra.mxu0 0
        %722 = vmatprep.subr.bf16.mxu0 0
        %723 = vmatpush1.bf16.msra.mxu0 0
        %724 = vmatprep.subr.bf16.mxu0 0
        %725 = vmatpush1.bf16.msra.mxu0 0
        %726 = vmatprep.subr.bf16.mxu0 0
        %727 = vmatpush1.bf16.msra.mxu0 0
        %728 = vmatprep.subr.bf16.mxu0 0
        %729 = vmatpush1.bf16.msra.mxu0 0
        %730 = vmatprep.subr.bf16.mxu0 0
        %731 = vmatpush1.bf16.msra.mxu0 0
        %732 = vmatprep.subr.bf16.mxu0 0
        %733 = vmatpush1.bf16.msra.mxu0 0
        %734 = vmatprep.subr.bf16.mxu0 0
        %735 = vmatpush1.bf16.msra.mxu0 0
        %736 = vmatprep.subr.bf16.mxu0 0
        %737 = vmatpush1.bf16.msra.mxu0 0
        %738 = vmatprep.subr.bf16.mxu0 0
        %739 = vmatpush1.bf16.msra.mxu0 0
        %740 = vmatprep.subr.bf16.mxu0 0
        %741 = vmatpush1.bf16.msra.mxu0 0
        %742 = vmatprep.subr.bf16.mxu0 0
        %743 = vmatpush1.bf16.msra.mxu0 0
        %744 = vmatprep.mubr.bf16.mxu0 0
        %745 = vmatmul.mubr.bf16.gmra.mrb[0].mxu0 %v710
        %v746 = vpop.f32.mrb[0].mxu0
        %v747 = vadd.f32 %v695, %v746
        %v748 = vpop.f32.mrb[0].mxu0
        %v749 = vpop.f32.mrb[0].mxu0
        %v750 = vpop.f32.mrb[0].mxu0
        %751 = vdwg.mxu0
        %v752 = vmul.f32 %v747, %v637
        %v753 = vmax.f32 %v752, 0.0
        %v754 = vpack.c.bf16 %v753, %v753
        %v756 = vsel %vm642, %v754, 0
        %758 = vmatprep.subr.bf16.mxu0 0
        %759 = vmatpush1.bf16.msra.mxu0 %v756
        %760 = vmatprep.subr.bf16.mxu0 0
        %761 = vmatpush1.bf16.msra.mxu0 0
        %762 = vmatprep.subr.bf16.mxu0 0
        %763 = vmatpush1.bf16.msra.mxu0 0
        %764 = vmatprep.subr.bf16.mxu0 0
        %765 = vmatpush1.bf16.msra.mxu0 0
        %766 = vmatprep.subr.bf16.mxu0 0
        %767 = vmatpush1.bf16.msra.mxu0 0
        %768 = vmatprep.subr.bf16.mxu0 0
        %769 = vmatpush1.bf16.msra.mxu0 0
        %770 = vmatprep.subr.bf16.mxu0 0
        %771 = vmatpush1.bf16.msra.mxu0 0
        %772 = vmatprep.subr.bf16.mxu0 0
        %773 = vmatpush1.bf16.msra.mxu0 0
        %774 = vmatprep.subr.bf16.mxu0 0
        %775 = vmatpush1.bf16.msra.mxu0 0
        %776 = vmatprep.subr.bf16.mxu0 0
        %777 = vmatpush1.bf16.msra.mxu0 0
        %778 = vmatprep.subr.bf16.mxu0 0
        %779 = vmatpush1.bf16.msra.mxu0 0
        %780 = vmatprep.subr.bf16.mxu0 0
        %781 = vmatpush1.bf16.msra.mxu0 0
        %782 = vmatprep.subr.bf16.mxu0 0
        %783 = vmatpush1.bf16.msra.mxu0 0
        %784 = vmatprep.subr.bf16.mxu0 0
        %785 = vmatpush1.bf16.msra.mxu0 0
        %786 = vmatprep.subr.bf16.mxu0 0
        %787 = vmatpush1.bf16.msra.mxu0 0
        %788 = vmatprep.subr.bf16.mxu0 0
        %789 = vmatpush1.bf16.msra.mxu0 0
        %790 = vmatprep.mubr.bf16.mxu0 0
        %791 = vmatmul.mubr.bf16.gmra.mrb[0].mxu0 %v640
        %v792 = vpop.f32.mrb[0].mxu0
        %v793 = vadd.f32 0.0, %v792
        %v794 = vpop.f32.mrb[0].mxu0
        %v795 = vpop.f32.mrb[0].mxu0
        %v796 = vpop.f32.mrb[0].mxu0
        %797 = vdwg.mxu0
        %v798 = vpack.c.bf16 %v793, %v793
        %s799 = scalar_lea.vmem [#allocation7], 16
        %v800 = vld [vmem:[%s799] sm:$0xf]
        %v801 = vld [vmem:[%s799 + $0x4] sm:$0xf]
        %v802 = vld [vmem:[%s799 + $0x8] sm:$0xf]
        %v803 = vld [vmem:[%s799 + $0xc] sm:$0xf]
        %s804 = scalar_lea.vmem %s4, 1
        %v805 = vld [vmem:[%s804] sm:$0x1]
        %v807 = vlaneseq
        %v808 = vshrl.u32 %v807, 7
        %v809 = vsub.s32 0, %v808
        %v810 = vrot.slane %v805, %v809
        %v816 = vunpack.c.l.b16 %v800
        %v817 = vunpack.c.l.b16 %v801
        %v818 = vunpack.c.l.b16 %v802
        %v819 = vunpack.c.l.b16 %v803
        %v820 = vpack.c.b16 %v817, %v816
        %v821 = vpack.c.b16 %v819, %v818
        %v825 = vsel %vm332, %v798, 0
        %827 = vmatprep.subr.bf16.mxu0 0
        %828 = vmatpush1.bf16.msra.mxu0 %v820
        %829 = vmatprep.subr.bf16.mxu0 0
        %830 = vmatpush1.bf16.msra.mxu0 %v821
        %831 = vmatprep.subr.bf16.mxu0 0
        %832 = vmatpush1.bf16.msra.mxu0 0
        %833 = vmatprep.subr.bf16.mxu0 0
        %834 = vmatpush1.bf16.msra.mxu0 0
        %835 = vmatprep.subr.bf16.mxu0 0
        %836 = vmatpush1.bf16.msra.mxu0 0
        %837 = vmatprep.subr.bf16.mxu0 0
        %838 = vmatpush1.bf16.msra.mxu0 0
        %839 = vmatprep.subr.bf16.mxu0 0
        %840 = vmatpush1.bf16.msra.mxu0 0
        %841 = vmatprep.subr.bf16.mxu0 0
        %842 = vmatpush1.bf16.msra.mxu0 0
        %843 = vmatprep.subr.bf16.mxu0 0
        %844 = vmatpush1.bf16.msra.mxu0 0
        %845 = vmatprep.subr.bf16.mxu0 0
        %846 = vmatpush1.bf16.msra.mxu0 0
        %847 = vmatprep.subr.bf16.mxu0 0
        %848 = vmatpush1.bf16.msra.mxu0 0
        %849 = vmatprep.subr.bf16.mxu0 0
        %850 = vmatpush1.bf16.msra.mxu0 0
        %851 = vmatprep.subr.bf16.mxu0 0
        %852 = vmatpush1.bf16.msra.mxu0 0
        %853 = vmatprep.subr.bf16.mxu0 0
        %854 = vmatpush1.bf16.msra.mxu0 0
        %855 = vmatprep.subr.bf16.mxu0 0
        %856 = vmatpush1.bf16.msra.mxu0 0
        %857 = vmatprep.subr.bf16.mxu0 0
        %858 = vmatpush1.bf16.msra.mxu0 0
        %859 = vmatprep.mubr.bf16.mxu0 0
        %860 = vmatmul.mubr.bf16.gmra.mrb[0].mxu0 %v825
        %v861 = vpop.f32.mrb[0].mxu0
        %v862 = vadd.f32 %v810, %v861
        %v863 = vpop.f32.mrb[0].mxu0
        %v864 = vpop.f32.mrb[0].mxu0
        %v865 = vpop.f32.mrb[0].mxu0
        %866 = vdwg.mxu0
        %v867 = vmul.f32 %v862, %v637
        %v868 = vmax.f32 %v867, 0.0
        %869 = vst.msk [vmem:[%s299] sm:$0xff] %vm332, %v868
        %s870 = sand.u32 %s146, 1
        %s871 = scalar_lea.sflag [#allocation4], %s870
        %s872 = sand.u32 %s146, 1
        %s873 = smul.addr %s872, 8
        %s874 = scalar_lea.vmem [#allocation8], %s873
        %s875 = sand.u32 %s172, 1
        %s876 = scalar_lea.sflag [#allocation10], %s875
        %s877 = sand.u32 %s172, 1
        %s878 = smul.addr %s877, 8
        %s879 = scalar_lea.vmem [#allocation9], %s878
        // Predicated region
        $region53: #{tpu_custom_call.1} parent=39 // pred_check
          %p880 = pneg %p156
        $region54: #{tpu_custom_call.1} parent=39 // pred_check_branch
          %882 = sbr.rel (%p880) target = $region56
        $region55: #{tpu_custom_call.1} parent=39 // pred_region
          %s884 = ssub.s32 128, 128
          %885 = vsyncadd %s871, %s884
          %s886 = smul.addr %s28, 128
          %s887 = scalar_lea.hbm %s5, %s886
          %s889 = sshll.u32 %s874, 4
          %s890 = int_to_ptr.vmem [resolvable:$true] %s889
          %892 = dma.vmem_to_hbm [thread:$0]  %s890, 128, %s887, %s871
        $region56: #{tpu_custom_call.1} parent=39 // pred_fallthru
          _
        // Predicated region
        $region57: #{tpu_custom_call.1} parent=39 // pred_check
          %p893 = pneg %p182
        $region58: #{tpu_custom_call.1} parent=39 // pred_check_branch
          %895 = sbr.rel (%p893) target = $region60
        $region59: #{tpu_custom_call.1} parent=39 // pred_region
          %s897 = ssub.s32 128, 128
          %898 = vsyncadd %s876, %s897
          %s899 = smul.addr %s28, 128
          %s900 = scalar_lea.hbm %s6, %s899
          %s902 = sshll.u32 %s879, 4
          %s903 = int_to_ptr.vmem [resolvable:$true] %s902
          %905 = dma.vmem_to_hbm [thread:$0]  %s903, 128, %s900, %s876
        $region60: #{tpu_custom_call.1} parent=39 // pred_fallthru
          _
      $region40: #{tpu_custom_call.1} parent=5 // pred_fallthru
        _
      %p906 = scmp.le.s32.totalorder 2, %s23
      // Predicated region
      $region61: #{tpu_custom_call.1} parent=5 // pred_check
        %p907 = pneg %p906
      $region62: #{tpu_custom_call.1} parent=5 // pred_check_branch
        %909 = sbr.rel (%p907) target = $region64
      $region63: #{tpu_custom_call.1} parent=5 // pred_region
        %s910 = ssub.s32 %s23, 2
        // Predicated region
        $region65: #{tpu_custom_call.1} parent=63 // pred_check
          %p911 = pneg %p162
        $region66: #{tpu_custom_call.1} parent=63 // pred_check_branch
          %913 = sbr.rel (%p911) target = $region68
        $region67: #{tpu_custom_call.1} parent=63 // pred_region
          %s914 = sand.u32 %s147, 1
          %s915 = scalar_lea.sflag [#allocation4], %s914
          %s916 = sand.u32 %s147, 1
          %s917 = smul.addr %s916, 8
          %s918 = scalar_lea.vmem [#allocation8], %s917
          %919 = dma.done %s915, 128
        $region68: #{tpu_custom_call.1} parent=63 // pred_fallthru
          _
        // Predicated region
        $region69: #{tpu_custom_call.1} parent=63 // pred_check
          %p920 = pneg %p188
        $region70: #{tpu_custom_call.1} parent=63 // pred_check_branch
          %922 = sbr.rel (%p920) target = $region72
        $region71: #{tpu_custom_call.1} parent=63 // pred_region
          %s923 = sand.u32 %s173, 1
          %s924 = scalar_lea.sflag [#allocation10], %s923
          %s925 = sand.u32 %s173, 1
          %s926 = smul.addr %s925, 8
          %s927 = scalar_lea.vmem [#allocation9], %s926
          %928 = dma.done %s924, 128
        $region72: #{tpu_custom_call.1} parent=63 // pred_fallthru
          _
      $region64: #{tpu_custom_call.1} parent=5 // pred_fallthru
        _
    $region6: #{tpu_custom_call.1} parent=1 // loop_footer
      %s27 = sadd.s32 1, %s23
    $region7: #{tpu_custom_call.1} parent=1 // loop_footer_branch
      %22 = sbr.rel target = $region3
    $region8: #{tpu_custom_call.1} parent=1 // loop_exit
      _
    %929 = vsyncpa [#allocation3], 1
    %s930 = scalar_lea.sflag [#allocation3], 1
    %931 = vsyncpa %s930, 1
    %932 = vsyncpa [#allocation6], 1
    %933 = vsyncpa [#allocation4], 1
    %s934 = scalar_lea.sflag [#allocation4], 1
    %935 = vsyncpa %s934, 1
    %936 = vsyncpa [#allocation10], 1
    %s937 = scalar_lea.sflag [#allocation10], 1
    %938 = vsyncpa %s937, 1

</llo_original>
